<compile_context>
chip_gen: v5e
topology: v5e:2x2
jax: 0.10.0
libtpu: 0.0.40
codegen_flags: <defaults>
</compile_context>

<pallas_src>
import functools

import jax
import jax.numpy as jnp
from jax import lax
from jax.experimental import pallas as pl
from jax.experimental.pallas import tpu as pltpu


def _sstcn_kernel(num_layers, T_valid, cdt,
                  x_ref, m_ref, t_ref,
                  w_in_ref, b_in_ref,
                  w_dil_ref, b_dil_ref,
                  w_pw_ref, b_pw_ref,
                  w_out_ref, b_out_ref,
                  o_ref):
    x = x_ref[...]                      # (dim, lanes)  lanes = B_blk * T_pad
    mask = m_ref[...]                   # (1, lanes)
    t_idx = t_ref[...]                  # (1, lanes) per-sample time index (int32)

    def mm(w, a):
        # MXU matmul in the compute dtype (bf16 by default) with f32 accumulation;
        # elementwise path stays f32.
        return jnp.dot(w, a.astype(cdt), preferred_element_type=jnp.float32)

    # input 1x1 conv == matmul over channels
    h = mm(w_in_ref[...], x) + b_in_ref[...]        # (F, lanes) f32

    for l in range(num_layers):
        d = 2 ** l
        # Dilated conv (k=3, padding=d, dilation=d), per-sample zero padding:
        #   y[:, t] = W0 @ h[:, t-d] + W1 @ h[:, t] + W2 @ h[:, t+d]
        # jnp.roll wraps across sample/padding boundaries; the per-sample time
        # index mask zeroes exactly those positions (PyTorch zero-padding).
        h_m = jnp.where(t_idx >= d, jnp.roll(h, d, axis=1), 0.0)             # h[:, t-d]
        h_p = jnp.where(t_idx < T_valid - d, jnp.roll(h, -d, axis=1), 0.0)   # h[:, t+d]

        # Fuse the three taps into one K = 3F matmul.
        h_cat = jnp.concatenate([h_m, h, h_p], axis=0)                       # (3F, lanes)
        y = mm(w_dil_ref[l], h_cat) + b_dil_ref[l]
        y = jnp.maximum(y, 0.0)                                              # ReLU
        y = mm(w_pw_ref[l], y) + b_pw_ref[l]
        # dropout == identity (eval mode)
        h = h + y                                                            # residual

    out = mm(w_out_ref[...], h) + b_out_ref[...]
    o_ref[...] = (out * mask).astype(o_ref.dtype)


def single_stage_model(x, mask, params, *, num_layers, batch_block=8, use_bf16=True):
    """x: (N, dim, T) f32, mask: (N, num_classes, T) f32 -> (N, num_classes, T)."""
    N, dim, T = x.shape
    F = params["w_in"].shape[0]
    C = params["w_out"].shape[0]

    # --- layout prep (perf feedback) ------------------------------------
    # Pad T to a multiple of 128 (lane-dense stores / aligned shifts) and pack
    # B_blk samples per grid step into the lane axis.
    T_pad = ((T + 127) // 128) * 128
    B_blk = max(1, min(batch_block, N))
    N_pad = ((N + B_blk - 1) // B_blk) * B_blk
    lanes = B_blk * T_pad

    xp = jnp.pad(x, ((0, N_pad - N), (0, 0), (0, T_pad - T)))
    mrow = jnp.pad(mask[:, 0:1, :], ((0, N_pad - N), (0, 0), (0, T_pad - T)))

    # (N_pad, dim, T_pad) -> (dim, N_pad*T_pad): lane index = sample*T_pad + t
    x2 = jnp.transpose(xp, (1, 0, 2)).reshape(dim, N_pad * T_pad)
    m2 = jnp.transpose(mrow, (1, 0, 2)).reshape(1, N_pad * T_pad)
    # per-sample time index (so dilation boundary masking stays per sample)
    t_idx = jnp.tile(jnp.arange(T_pad, dtype=jnp.int32), N_pad).reshape(1, N_pad * T_pad)

    # Fuse dilated-conv taps: (L, 3, O, I) -> (L, O, 3*I) (concat taps on input axis)
    w_dil_flat = jnp.transpose(params["w_dil"], (0, 2, 1, 3)).reshape(num_layers, F, 3 * F)

    cdt = jnp.bfloat16 if use_bf16 else jnp.float32
    w_in = params["w_in"].astype(cdt)
    w_dil = w_dil_flat.astype(cdt)
    w_pw = params["w_pw"].astype(cdt)
    w_out = params["w_out"].astype(cdt)

    grid = (N_pad // B_blk,)

    full = lambda a: pl.BlockSpec(a.shape, lambda n: (0,) * a.ndim)
    lane_spec = lambda rows: pl.BlockSpec((rows, lanes), lambda n: (0, n))

    kernel = functools.partial(_sstcn_kernel, num_layers, T, cdt)

    out2 = pl.pallas_call(
        kernel,
        out_shape=jax.ShapeDtypeStruct((C, N_pad * T_pad), x.dtype),
        grid_spec=pltpu.PrefetchScalarGridSpec(
            num_scalar_prefetch=0,
            grid=grid,
            in_specs=[
                lane_spec(dim),          # x (packed)
                lane_spec(1),            # mask row (packed)
                lane_spec(1),            # per-sample time index
                full(w_in), full(params["b_in"]),
                full(w_dil), full(params["b_dil"]),
                full(w_pw), full(params["b_pw"]),
                full(w_out), full(params["b_out"]),
            ],
            out_specs=lane_spec(C),
        ),
        compiler_params=pltpu.CompilerParams(dimension_semantics=("parallel",)),
    )(x2, m2, t_idx,
      w_in, params["b_in"],
      w_dil, params["b_dil"],
      w_pw, params["b_pw"],
      w_out, params["b_out"])

    # unpack: (C, N_pad*T_pad) -> (N, C, T)
    out = out2.reshape(C, N_pad, T_pad).transpose(1, 0, 2)[:N, :, :T]
    return out


def reference_forward(x, mask, params, *, num_layers):
    """Pure-JAX reference (mirrors the PyTorch module in eval mode), f32."""
    prec = lax.Precision.HIGHEST

    def conv1x1(h, w, b):  # w: (O, I), b: (O, 1)
        return jnp.einsum("oi,nit->not", w, h, precision=prec) + b[None]

    h = conv1x1(x, params["w_in"], params["b_in"])
    for l in range(num_layers):
        d = 2 ** l
        w_conv = jnp.transpose(params["w_dil"][l], (1, 2, 0))   # (O, I, K=3)
        y = lax.conv_general_dilated(
            h, w_conv, window_strides=(1,), padding=[(d, d)],
            rhs_dilation=(d,), dimension_numbers=("NCH", "OIH", "NCH"),
            precision=prec)
        y = y + params["b_dil"][l][None]
        y = jax.nn.relu(y)
        y = conv1x1(y, params["w_pw"][l], params["b_pw"][l])
        h = h + y
    out = conv1x1(h, params["w_out"], params["b_out"])
    return out * mask[:, 0:1, :]


def init_params(key, num_layers, num_f_maps, dim, num_classes):
    ks = jax.random.split(key, 10)
    s = 0.1
    return {
        "w_in":  s * jax.random.normal(ks[0], (num_f_maps, dim), jnp.float32),
        "b_in":  s * jax.random.normal(ks[1], (num_f_maps, 1), jnp.float32),
        # dilated conv weights stored as (L, tap, O, I); tap k corresponds to
        # PyTorch weight[..., k] (offsets -d, 0, +d).
        "w_dil": s * jax.random.normal(ks[2], (num_layers, 3, num_f_maps, num_f_maps), jnp.float32),
        "b_dil": s * jax.random.normal(ks[3], (num_layers, num_f_maps, 1), jnp.float32),
        "w_pw":  s * jax.random.normal(ks[4], (num_layers, num_f_maps, num_f_maps), jnp.float32),
        "b_pw":  s * jax.random.normal(ks[5], (num_layers, num_f_maps, 1), jnp.float32),
        "w_out": s * jax.random.normal(ks[6], (num_classes, num_f_maps), jnp.float32),
        "b_out": s * jax.random.normal(ks[7], (num_classes, 1), jnp.float32),
    }


if __name__ == "__main__":
    num_layers, num_f_maps, dim, num_classes = 3, 32, 16, 8
    N, T = 3, 100   # deliberately ragged: exercises batch packing + time padding

    key = jax.random.PRNGKey(0)
    kx, km, kp = jax.random.split(key, 3)
    x = jax.random.normal(kx, (N, dim, T), jnp.float32)
    # binary temporal mask (same value across channels, as in MS-TCN)
    valid = (jax.random.uniform(km, (N, 1, T)) > 0.2).astype(jnp.float32)
    mask = jnp.broadcast_to(valid, (N, num_classes, T))
    params = init_params(kp, num_layers, num_f_maps, dim, num_classes)

    ref = reference_forward(x, mask, params, num_layers=num_layers)

    # f32-matmul path: tight check that the kernel math matches the module.
    out_f32 = single_stage_model(x, mask, params, num_layers=num_layers,
                                 batch_block=2, use_bf16=False)
    out_f32 = jax.block_until_ready(out_f32)
    assert out_f32.shape == (N, num_classes, T)
    assert jnp.allclose(out_f32, ref, atol=5e-3, rtol=5e-3), \
        float(jnp.max(jnp.abs(out_f32 - ref)))

    # Default fast path: bf16 MXU matmuls with f32 accumulation.
    out = single_stage_model(x, mask, params, num_layers=num_layers, batch_block=2)
    out = jax.block_until_ready(out)
    assert out.shape == (N, num_classes, T)
    assert jnp.allclose(out, ref, atol=3e-2, rtol=3e-2), \
        float(jnp.max(jnp.abs(out - ref)))

    print("KERNEL_OK")
</pallas_src>

<mosaic_0001>
module attributes {stable_mosaic.version = 11 : i64} {
  func.func @_sstcn_kernel(%arg0: i32, %arg1: memref<16x256xf32, #tpu.memory_space<vmem>>, %arg2: memref<1x256xf32, #tpu.memory_space<vmem>>, %arg3: memref<1x256xi32, #tpu.memory_space<vmem>>, %arg4: memref<32x16xf32, #tpu.memory_space<vmem>>, %arg5: memref<32x1xf32, #tpu.memory_space<vmem>>, %arg6: memref<3x32x96xf32, #tpu.memory_space<vmem>>, %arg7: memref<3x32x1xf32, #tpu.memory_space<vmem>>, %arg8: memref<3x32x32xf32, #tpu.memory_space<vmem>>, %arg9: memref<3x32x1xf32, #tpu.memory_space<vmem>>, %arg10: memref<8x32xf32, #tpu.memory_space<vmem>>, %arg11: memref<8x1xf32, #tpu.memory_space<vmem>>, %arg12: memref<8x256xf32, #tpu.memory_space<vmem>>) attributes {dimension_semantics = [#tpu.dimension_semantics<parallel>], iteration_bounds = array<i64: 2>, scalar_prefetch = 0 : i64, scratch_operands = 0 : i64, tpu.core_type = #tpu.core_type<tc>, window_params = [{transform_indices = @transform_0, window_bounds = array<i64: 16, 256>}, {transform_indices = @transform_1, window_bounds = array<i64: 1, 256>}, {transform_indices = @transform_2, window_bounds = array<i64: 1, 256>}, {pipeline_mode = #tpu.pipeline_mode<synchronous>, transform_indices = @transform_3, window_bounds = array<i64: 32, 16>}, {pipeline_mode = #tpu.pipeline_mode<synchronous>, transform_indices = @transform_4, window_bounds = array<i64: 32, 1>}, {pipeline_mode = #tpu.pipeline_mode<synchronous>, transform_indices = @transform_5, window_bounds = array<i64: 3, 32, 96>}, {pipeline_mode = #tpu.pipeline_mode<synchronous>, transform_indices = @transform_6, window_bounds = array<i64: 3, 32, 1>}, {pipeline_mode = #tpu.pipeline_mode<synchronous>, transform_indices = @transform_7, window_bounds = array<i64: 3, 32, 32>}, {pipeline_mode = #tpu.pipeline_mode<synchronous>, transform_indices = @transform_8, window_bounds = array<i64: 3, 32, 1>}, {pipeline_mode = #tpu.pipeline_mode<synchronous>, transform_indices = @transform_9, window_bounds = array<i64: 8, 32>}, {pipeline_mode = #tpu.pipeline_mode<synchronous>, transform_indices = @transform_10, window_bounds = array<i64: 8, 1>}, {transform_indices = @transform_11, window_bounds = array<i64: 8, 256>}]} {
    %c0 = arith.constant 0 : index
    %c0_0 = arith.constant 0 : index
    %0 = vector.load %arg1[%c0, %c0_0] : memref<16x256xf32, #tpu.memory_space<vmem>>, vector<16x256xf32>
    %c0_1 = arith.constant 0 : index
    %c0_2 = arith.constant 0 : index
    %1 = vector.load %arg2[%c0_1, %c0_2] : memref<1x256xf32, #tpu.memory_space<vmem>>, vector<1x256xf32>
    %c0_3 = arith.constant 0 : index
    %c0_4 = arith.constant 0 : index
    %2 = vector.load %arg3[%c0_3, %c0_4] : memref<1x256xi32, #tpu.memory_space<vmem>>, vector<1x256xi32>
    %c0_5 = arith.constant 0 : index
    %c0_6 = arith.constant 0 : index
    %3 = vector.load %arg4[%c0_5, %c0_6] : memref<32x16xf32, #tpu.memory_space<vmem>>, vector<32x16xf32>
    %cst = arith.constant dense<0.000000e+00> : vector<32x256xf32>
    %4 = tpu.matmul %3, %0, %cst {dimension_numbers = #tpu.dot_dimension_numbers<[1], [0], [0], [1], [0, 0, 1, 1], [], []>} : vector<32x16xf32>, vector<16x256xf32>, vector<32x256xf32> -> vector<32x256xf32>
    %c0_7 = arith.constant 0 : index
    %c0_8 = arith.constant 0 : index
    %5 = vector.load %arg5[%c0_7, %c0_8] : memref<32x1xf32, #tpu.memory_space<vmem>>, vector<32x1xf32>
    %6 = vector.broadcast %5 : vector<32x1xf32> to vector<32x256xf32>
    %7 = arith.addf %4, %6 : vector<32x256xf32>
    %c1_i32 = arith.constant 1 : i32
    %8 = vector.broadcast %c1_i32 : i32 to vector<1x256xi32>
    %9 = arith.cmpi sge, %2, %8 : vector<1x256xi32>
    %10 = vector.extract_strided_slice %7 {offsets = [0, 255], sizes = [32, 1], strides = [1, 1]} : vector<32x256xf32> to vector<32x1xf32>
    %11 = vector.extract_strided_slice %7 {offsets = [0, 0], sizes = [32, 255], strides = [1, 1]} : vector<32x256xf32> to vector<32x255xf32>
    %12 = tpu.concatenate %10, %11 in 1 : vector<32x1xf32>, vector<32x255xf32> -> vector<32x256xf32>
    %cst_9 = arith.constant 0.000000e+00 : f32
    %13 = vector.shape_cast %9 : vector<1x256xi1> to vector<1x256xi1>
    %14 = vector.broadcast %13 : vector<1x256xi1> to vector<32x256xi1>
    %15 = vector.broadcast %cst_9 : f32 to vector<32x256xf32>
    %16 = arith.select %14, %12, %15 : vector<32x256xi1>, vector<32x256xf32>
    %c99_i32 = arith.constant 99 : i32
    %17 = vector.broadcast %c99_i32 : i32 to vector<1x256xi32>
    %18 = arith.cmpi slt, %2, %17 : vector<1x256xi32>
    %19 = vector.extract_strided_slice %7 {offsets = [0, 1], sizes = [32, 255], strides = [1, 1]} : vector<32x256xf32> to vector<32x255xf32>
    %20 = vector.extract_strided_slice %7 {offsets = [0, 0], sizes = [32, 1], strides = [1, 1]} : vector<32x256xf32> to vector<32x1xf32>
    %21 = tpu.concatenate %19, %20 in 1 : vector<32x255xf32>, vector<32x1xf32> -> vector<32x256xf32>
    %cst_10 = arith.constant 0.000000e+00 : f32
    %22 = vector.shape_cast %18 : vector<1x256xi1> to vector<1x256xi1>
    %23 = vector.broadcast %22 : vector<1x256xi1> to vector<32x256xi1>
    %24 = vector.broadcast %cst_10 : f32 to vector<32x256xf32>
    %25 = arith.select %23, %21, %24 : vector<32x256xi1>, vector<32x256xf32>
    %26 = tpu.concatenate %16, %7, %25 in 0 : vector<32x256xf32>, vector<32x256xf32>, vector<32x256xf32> -> vector<96x256xf32>
    %c0_11 = arith.constant 0 : index
    %c0_12 = arith.constant 0 : index
    %c0_13 = arith.constant 0 : index
    %27 = vector.load %arg6[%c0_11, %c0_12, %c0_13] : memref<3x32x96xf32, #tpu.memory_space<vmem>>, vector<1x32x96xf32>
    %28 = vector.shape_cast %27 : vector<1x32x96xf32> to vector<32x96xf32>
    %cst_14 = arith.constant dense<0.000000e+00> : vector<32x256xf32>
    %29 = tpu.matmul %28, %26, %cst_14 {dimension_numbers = #tpu.dot_dimension_numbers<[1], [0], [0], [1], [0, 0, 1, 1], [], []>} : vector<32x96xf32>, vector<96x256xf32>, vector<32x256xf32> -> vector<32x256xf32>
    %c0_15 = arith.constant 0 : index
    %c0_16 = arith.constant 0 : index
    %c0_17 = arith.constant 0 : index
    %30 = vector.load %arg7[%c0_15, %c0_16, %c0_17] : memref<3x32x1xf32, #tpu.memory_space<vmem>>, vector<1x32x1xf32>
    %31 = vector.shape_cast %30 : vector<1x32x1xf32> to vector<32x1xf32>
    %32 = vector.broadcast %31 : vector<32x1xf32> to vector<32x256xf32>
    %33 = arith.addf %29, %32 : vector<32x256xf32>
    %cst_18 = arith.constant 0.000000e+00 : f32
    %34 = vector.broadcast %cst_18 : f32 to vector<32x256xf32>
    %35 = arith.maximumf %33, %34 : vector<32x256xf32>
    %c0_19 = arith.constant 0 : index
    %c0_20 = arith.constant 0 : index
    %c0_21 = arith.constant 0 : index
    %36 = vector.load %arg8[%c0_19, %c0_20, %c0_21] : memref<3x32x32xf32, #tpu.memory_space<vmem>>, vector<1x32x32xf32>
    %37 = vector.shape_cast %36 : vector<1x32x32xf32> to vector<32x32xf32>
    %cst_22 = arith.constant dense<0.000000e+00> : vector<32x256xf32>
    %38 = tpu.matmul %37, %35, %cst_22 {dimension_numbers = #tpu.dot_dimension_numbers<[1], [0], [0], [1], [0, 0, 1, 1], [], []>} : vector<32x32xf32>, vector<32x256xf32>, vector<32x256xf32> -> vector<32x256xf32>
    %c0_23 = arith.constant 0 : index
    %c0_24 = arith.constant 0 : index
    %c0_25 = arith.constant 0 : index
    %39 = vector.load %arg9[%c0_23, %c0_24, %c0_25] : memref<3x32x1xf32, #tpu.memory_space<vmem>>, vector<1x32x1xf32>
    %40 = vector.shape_cast %39 : vector<1x32x1xf32> to vector<32x1xf32>
    %41 = vector.broadcast %40 : vector<32x1xf32> to vector<32x256xf32>
    %42 = arith.addf %38, %41 : vector<32x256xf32>
    %43 = arith.addf %7, %42 : vector<32x256xf32>
    %c2_i32 = arith.constant 2 : i32
    %44 = vector.broadcast %c2_i32 : i32 to vector<1x256xi32>
    %45 = arith.cmpi sge, %2, %44 : vector<1x256xi32>
    %46 = vector.extract_strided_slice %43 {offsets = [0, 254], sizes = [32, 2], strides = [1, 1]} : vector<32x256xf32> to vector<32x2xf32>
    %47 = vector.extract_strided_slice %43 {offsets = [0, 0], sizes = [32, 254], strides = [1, 1]} : vector<32x256xf32> to vector<32x254xf32>
    %48 = tpu.concatenate %46, %47 in 1 : vector<32x2xf32>, vector<32x254xf32> -> vector<32x256xf32>
    %cst_26 = arith.constant 0.000000e+00 : f32
    %49 = vector.shape_cast %45 : vector<1x256xi1> to vector<1x256xi1>
    %50 = vector.broadcast %49 : vector<1x256xi1> to vector<32x256xi1>
    %51 = vector.broadcast %cst_26 : f32 to vector<32x256xf32>
    %52 = arith.select %50, %48, %51 : vector<32x256xi1>, vector<32x256xf32>
    %c98_i32 = arith.constant 98 : i32
    %53 = vector.broadcast %c98_i32 : i32 to vector<1x256xi32>
    %54 = arith.cmpi slt, %2, %53 : vector<1x256xi32>
    %55 = vector.extract_strided_slice %43 {offsets = [0, 2], sizes = [32, 254], strides = [1, 1]} : vector<32x256xf32> to vector<32x254xf32>
    %56 = vector.extract_strided_slice %43 {offsets = [0, 0], sizes = [32, 2], strides = [1, 1]} : vector<32x256xf32> to vector<32x2xf32>
    %57 = tpu.concatenate %55, %56 in 1 : vector<32x254xf32>, vector<32x2xf32> -> vector<32x256xf32>
    %cst_27 = arith.constant 0.000000e+00 : f32
    %58 = vector.shape_cast %54 : vector<1x256xi1> to vector<1x256xi1>
    %59 = vector.broadcast %58 : vector<1x256xi1> to vector<32x256xi1>
    %60 = vector.broadcast %cst_27 : f32 to vector<32x256xf32>
    %61 = arith.select %59, %57, %60 : vector<32x256xi1>, vector<32x256xf32>
    %62 = tpu.concatenate %52, %43, %61 in 0 : vector<32x256xf32>, vector<32x256xf32>, vector<32x256xf32> -> vector<96x256xf32>
    %c1 = arith.constant 1 : index
    %c0_28 = arith.constant 0 : index
    %c0_29 = arith.constant 0 : index
    %63 = vector.load %arg6[%c1, %c0_28, %c0_29] : memref<3x32x96xf32, #tpu.memory_space<vmem>>, vector<1x32x96xf32>
    %64 = vector.shape_cast %63 : vector<1x32x96xf32> to vector<32x96xf32>
    %cst_30 = arith.constant dense<0.000000e+00> : vector<32x256xf32>
    %65 = tpu.matmul %64, %62, %cst_30 {dimension_numbers = #tpu.dot_dimension_numbers<[1], [0], [0], [1], [0, 0, 1, 1], [], []>} : vector<32x96xf32>, vector<96x256xf32>, vector<32x256xf32> -> vector<32x256xf32>
    %c1_31 = arith.constant 1 : index
    %c0_32 = arith.constant 0 : index
    %c0_33 = arith.constant 0 : index
    %66 = vector.load %arg7[%c1_31, %c0_32, %c0_33] : memref<3x32x1xf32, #tpu.memory_space<vmem>>, vector<1x32x1xf32>
    %67 = vector.shape_cast %66 : vector<1x32x1xf32> to vector<32x1xf32>
    %68 = vector.broadcast %67 : vector<32x1xf32> to vector<32x256xf32>
    %69 = arith.addf %65, %68 : vector<32x256xf32>
    %cst_34 = arith.constant 0.000000e+00 : f32
    %70 = vector.broadcast %cst_34 : f32 to vector<32x256xf32>
    %71 = arith.maximumf %69, %70 : vector<32x256xf32>
    %c1_35 = arith.constant 1 : index
    %c0_36 = arith.constant 0 : index
    %c0_37 = arith.constant 0 : index
    %72 = vector.load %arg8[%c1_35, %c0_36, %c0_37] : memref<3x32x32xf32, #tpu.memory_space<vmem>>, vector<1x32x32xf32>
    %73 = vector.shape_cast %72 : vector<1x32x32xf32> to vector<32x32xf32>
    %cst_38 = arith.constant dense<0.000000e+00> : vector<32x256xf32>
    %74 = tpu.matmul %73, %71, %cst_38 {dimension_numbers = #tpu.dot_dimension_numbers<[1], [0], [0], [1], [0, 0, 1, 1], [], []>} : vector<32x32xf32>, vector<32x256xf32>, vector<32x256xf32> -> vector<32x256xf32>
    %c1_39 = arith.constant 1 : index
    %c0_40 = arith.constant 0 : index
    %c0_41 = arith.constant 0 : index
    %75 = vector.load %arg9[%c1_39, %c0_40, %c0_41] : memref<3x32x1xf32, #tpu.memory_space<vmem>>, vector<1x32x1xf32>
    %76 = vector.shape_cast %75 : vector<1x32x1xf32> to vector<32x1xf32>
    %77 = vector.broadcast %76 : vector<32x1xf32> to vector<32x256xf32>
    %78 = arith.addf %74, %77 : vector<32x256xf32>
    %79 = arith.addf %43, %78 : vector<32x256xf32>
    %c4_i32 = arith.constant 4 : i32
    %80 = vector.broadcast %c4_i32 : i32 to vector<1x256xi32>
    %81 = arith.cmpi sge, %2, %80 : vector<1x256xi32>
    %82 = vector.extract_strided_slice %79 {offsets = [0, 252], sizes = [32, 4], strides = [1, 1]} : vector<32x256xf32> to vector<32x4xf32>
    %83 = vector.extract_strided_slice %79 {offsets = [0, 0], sizes = [32, 252], strides = [1, 1]} : vector<32x256xf32> to vector<32x252xf32>
    %84 = tpu.concatenate %82, %83 in 1 : vector<32x4xf32>, vector<32x252xf32> -> vector<32x256xf32>
    %cst_42 = arith.constant 0.000000e+00 : f32
    %85 = vector.shape_cast %81 : vector<1x256xi1> to vector<1x256xi1>
    %86 = vector.broadcast %85 : vector<1x256xi1> to vector<32x256xi1>
    %87 = vector.broadcast %cst_42 : f32 to vector<32x256xf32>
    %88 = arith.select %86, %84, %87 : vector<32x256xi1>, vector<32x256xf32>
    %c96_i32 = arith.constant 96 : i32
    %89 = vector.broadcast %c96_i32 : i32 to vector<1x256xi32>
    %90 = arith.cmpi slt, %2, %89 : vector<1x256xi32>
    %91 = vector.extract_strided_slice %79 {offsets = [0, 4], sizes = [32, 252], strides = [1, 1]} : vector<32x256xf32> to vector<32x252xf32>
    %92 = vector.extract_strided_slice %79 {offsets = [0, 0], sizes = [32, 4], strides = [1, 1]} : vector<32x256xf32> to vector<32x4xf32>
    %93 = tpu.concatenate %91, %92 in 1 : vector<32x252xf32>, vector<32x4xf32> -> vector<32x256xf32>
    %cst_43 = arith.constant 0.000000e+00 : f32
    %94 = vector.shape_cast %90 : vector<1x256xi1> to vector<1x256xi1>
    %95 = vector.broadcast %94 : vector<1x256xi1> to vector<32x256xi1>
    %96 = vector.broadcast %cst_43 : f32 to vector<32x256xf32>
    %97 = arith.select %95, %93, %96 : vector<32x256xi1>, vector<32x256xf32>
    %98 = tpu.concatenate %88, %79, %97 in 0 : vector<32x256xf32>, vector<32x256xf32>, vector<32x256xf32> -> vector<96x256xf32>
    %c2 = arith.constant 2 : index
    %c0_44 = arith.constant 0 : index
    %c0_45 = arith.constant 0 : index
    %99 = vector.load %arg6[%c2, %c0_44, %c0_45] : memref<3x32x96xf32, #tpu.memory_space<vmem>>, vector<1x32x96xf32>
    %100 = vector.shape_cast %99 : vector<1x32x96xf32> to vector<32x96xf32>
    %cst_46 = arith.constant dense<0.000000e+00> : vector<32x256xf32>
    %101 = tpu.matmul %100, %98, %cst_46 {dimension_numbers = #tpu.dot_dimension_numbers<[1], [0], [0], [1], [0, 0, 1, 1], [], []>} : vector<32x96xf32>, vector<96x256xf32>, vector<32x256xf32> -> vector<32x256xf32>
    %c2_47 = arith.constant 2 : index
    %c0_48 = arith.constant 0 : index
    %c0_49 = arith.constant 0 : index
    %102 = vector.load %arg7[%c2_47, %c0_48, %c0_49] : memref<3x32x1xf32, #tpu.memory_space<vmem>>, vector<1x32x1xf32>
    %103 = vector.shape_cast %102 : vector<1x32x1xf32> to vector<32x1xf32>
    %104 = vector.broadcast %103 : vector<32x1xf32> to vector<32x256xf32>
    %105 = arith.addf %101, %104 : vector<32x256xf32>
    %cst_50 = arith.constant 0.000000e+00 : f32
    %106 = vector.broadcast %cst_50 : f32 to vector<32x256xf32>
    %107 = arith.maximumf %105, %106 : vector<32x256xf32>
    %c2_51 = arith.constant 2 : index
    %c0_52 = arith.constant 0 : index
    %c0_53 = arith.constant 0 : index
    %108 = vector.load %arg8[%c2_51, %c0_52, %c0_53] : memref<3x32x32xf32, #tpu.memory_space<vmem>>, vector<1x32x32xf32>
    %109 = vector.shape_cast %108 : vector<1x32x32xf32> to vector<32x32xf32>
    %cst_54 = arith.constant dense<0.000000e+00> : vector<32x256xf32>
    %110 = tpu.matmul %109, %107, %cst_54 {dimension_numbers = #tpu.dot_dimension_numbers<[1], [0], [0], [1], [0, 0, 1, 1], [], []>} : vector<32x32xf32>, vector<32x256xf32>, vector<32x256xf32> -> vector<32x256xf32>
    %c2_55 = arith.constant 2 : index
    %c0_56 = arith.constant 0 : index
    %c0_57 = arith.constant 0 : index
    %111 = vector.load %arg9[%c2_55, %c0_56, %c0_57] : memref<3x32x1xf32, #tpu.memory_space<vmem>>, vector<1x32x1xf32>
    %112 = vector.shape_cast %111 : vector<1x32x1xf32> to vector<32x1xf32>
    %113 = vector.broadcast %112 : vector<32x1xf32> to vector<32x256xf32>
    %114 = arith.addf %110, %113 : vector<32x256xf32>
    %115 = arith.addf %79, %114 : vector<32x256xf32>
    %c0_58 = arith.constant 0 : index
    %c0_59 = arith.constant 0 : index
    %116 = vector.load %arg10[%c0_58, %c0_59] : memref<8x32xf32, #tpu.memory_space<vmem>>, vector<8x32xf32>
    %cst_60 = arith.constant dense<0.000000e+00> : vector<8x256xf32>
    %117 = tpu.matmul %116, %115, %cst_60 {dimension_numbers = #tpu.dot_dimension_numbers<[1], [0], [0], [1], [0, 0, 1, 1], [], []>} : vector<8x32xf32>, vector<32x256xf32>, vector<8x256xf32> -> vector<8x256xf32>
    %c0_61 = arith.constant 0 : index
    %c0_62 = arith.constant 0 : index
    %118 = vector.load %arg11[%c0_61, %c0_62] : memref<8x1xf32, #tpu.memory_space<vmem>>, vector<8x1xf32>
    %119 = vector.broadcast %118 : vector<8x1xf32> to vector<8x256xf32>
    %120 = arith.addf %117, %119 : vector<8x256xf32>
    %121 = vector.broadcast %1 : vector<1x256xf32> to vector<8x256xf32>
    %122 = arith.mulf %120, %121 : vector<8x256xf32>
    %c0_63 = arith.constant 0 : index
    %c0_64 = arith.constant 0 : index
    %123 = vector.load %arg12[%c0_63, %c0_64] : memref<8x256xf32, #tpu.memory_space<vmem>>, vector<8x256xf32>
    tpu.vector_store %arg12[%c0_63, %c0_64], %122 {strides = array<i32>} : memref<8x256xf32, #tpu.memory_space<vmem>>, vector<8x256xf32>,
    return
  }
  func.func @transform_0(%arg0: i32) -> (i32, i32) {
    %c0_i32 = arith.constant 0 : i32
    %c0_i32_0 = arith.constant 0 : i32
    return %c0_i32, %arg0 : i32, i32
  }
  func.func @transform_1(%arg0: i32) -> (i32, i32) {
    %c0_i32 = arith.constant 0 : i32
    %c0_i32_0 = arith.constant 0 : i32
    return %c0_i32, %arg0 : i32, i32
  }
  func.func @transform_2(%arg0: i32) -> (i32, i32) {
    %c0_i32 = arith.constant 0 : i32
    %c0_i32_0 = arith.constant 0 : i32
    return %c0_i32, %arg0 : i32, i32
  }
  func.func @transform_3(%arg0: i32) -> (i32, i32) {
    %c0_i32 = arith.constant 0 : i32
    %c0_i32_0 = arith.constant 0 : i32
    %c0_i32_1 = arith.constant 0 : i32
    return %c0_i32, %c0_i32_0 : i32, i32
  }
  func.func @transform_4(%arg0: i32) -> (i32, i32) {
    %c0_i32 = arith.constant 0 : i32
    %c0_i32_0 = arith.constant 0 : i32
    %c0_i32_1 = arith.constant 0 : i32
    return %c0_i32, %c0_i32_0 : i32, i32
  }
  func.func @transform_5(%arg0: i32) -> (i32, i32, i32) {
    %c0_i32 = arith.constant 0 : i32
    %c0_i32_0 = arith.constant 0 : i32
    %c0_i32_1 = arith.constant 0 : i32
    %c0_i32_2 = arith.constant 0 : i32
    return %c0_i32, %c0_i32_0, %c0_i32_1 : i32, i32, i32
  }
  func.func @transform_6(%arg0: i32) -> (i32, i32, i32) {
    %c0_i32 = arith.constant 0 : i32
    %c0_i32_0 = arith.constant 0 : i32
    %c0_i32_1 = arith.constant 0 : i32
    %c0_i32_2 = arith.constant 0 : i32
    return %c0_i32, %c0_i32_0, %c0_i32_1 : i32, i32, i32
  }
  func.func @transform_7(%arg0: i32) -> (i32, i32, i32) {
    %c0_i32 = arith.constant 0 : i32
    %c0_i32_0 = arith.constant 0 : i32
    %c0_i32_1 = arith.constant 0 : i32
    %c0_i32_2 = arith.constant 0 : i32
    return %c0_i32, %c0_i32_0, %c0_i32_1 : i32, i32, i32
  }
  func.func @transform_8(%arg0: i32) -> (i32, i32, i32) {
    %c0_i32 = arith.constant 0 : i32
    %c0_i32_0 = arith.constant 0 : i32
    %c0_i32_1 = arith.constant 0 : i32
    %c0_i32_2 = arith.constant 0 : i32
    return %c0_i32, %c0_i32_0, %c0_i32_1 : i32, i32, i32
  }
  func.func @transform_9(%arg0: i32) -> (i32, i32) {
    %c0_i32 = arith.constant 0 : i32
    %c0_i32_0 = arith.constant 0 : i32
    %c0_i32_1 = arith.constant 0 : i32
    return %c0_i32, %c0_i32_0 : i32, i32
  }
  func.func @transform_10(%arg0: i32) -> (i32, i32) {
    %c0_i32 = arith.constant 0 : i32
    %c0_i32_0 = arith.constant 0 : i32
    %c0_i32_1 = arith.constant 0 : i32
    return %c0_i32, %c0_i32_0 : i32, i32
  }
  func.func @transform_11(%arg0: i32) -> (i32, i32) {
    %c0_i32 = arith.constant 0 : i32
    %c0_i32_0 = arith.constant 0 : i32
    return %c0_i32, %arg0 : i32, i32
  }
}

</mosaic_0001>

<llo_original>
// kernel: tpu_custom_call.1
$region0: #{tpu_custom_call.1}
  #allocation0 [shape = 'u32[]', space=smem, size = 0x4, offset = 0x4, fixed_abs, tag = 'smem constant byte address 0x4 - core index']
  #allocation1 [shape = 'u32[72,128]{1,0:T(1,128)}', space=vmem, size = 0x9000, scoped, tag = 'internal scratch']
  %s0 = inlined_call_operand.vmem [shape: f32[16,512], index: 0, kind: input, shape index: {}]
  %s1 = inlined_call_operand.vmem [shape: f32[1,512], index: 1, kind: input, shape index: {}]
  %s2 = inlined_call_operand.vmem [shape: s32[1,512], index: 2, kind: input, shape index: {}]
  %s3 = inlined_call_operand.vmem [shape: f32[32,16], index: 3, kind: input, shape index: {}]
  %s4 = inlined_call_operand.vmem [shape: f32[32,1], index: 4, kind: input, shape index: {}]
  %s5 = inlined_call_operand.vmem [shape: f32[3,32,96], index: 5, kind: input, shape index: {}]
  %s6 = inlined_call_operand.vmem [shape: f32[3,32,1], index: 6, kind: input, shape index: {}]
  %s7 = inlined_call_operand.vmem [shape: f32[3,32,32], index: 7, kind: input, shape index: {}]
  %s8 = inlined_call_operand.vmem [shape: f32[3,32,1], index: 8, kind: input, shape index: {}]
  %s9 = inlined_call_operand.vmem [shape: f32[8,32], index: 9, kind: input, shape index: {}]
  %s10 = inlined_call_operand.vmem [shape: f32[8,1], index: 10, kind: input, shape index: {}]
  %s11 = inlined_call_operand.hbm [shape: f32[8,512], index: 11, kind: output, shape index: {}]
  %s12 = sld [smem:[#allocation0]]
  $region100: #{tpu_custom_call.1} parent=0
    _
  %s14 = ssub.s32 1, %s12
  %s15 = scalar_select 0, %s14, %s12
  $region1: #{tpu_custom_call.1} parent=0
    #allocation2 [shape = 'u8[32768]{0}', space=vmem, size = 0x8000, scoped, tag = 'input window, operand 0']
    #allocation3 [shape = 'u8[16384]{0}', space=vmem, size = 0x4000, scoped, tag = 'output window, operand 0']
    #allocation4 [shape = 's32[2]{0}', space=sflag, size = 0x8, scoped, tag = 'scoped memory for tpu_custom_call.1']
    %16 = vsyncpa [#allocation4], 0
    %s17 = scalar_lea.sflag [#allocation4], 1
    %18 = vsyncpa %s17, 0
    loop: start=0, step=1, limit=4
    $region2: #{tpu_custom_call.1} parent=1 // loop_pre_header
      _
    $region3: #{tpu_custom_call.1} parent=1 // loop_header
      %s20 = sphi 0, %s24
      %p21 = scmp.ge.s32.totalorder %s20, 4
      %s30 = sphi 0, %s32
      %s33 = sphi 0, %s30
      %s34 = sphi 0, %s33
      %s50 = sphi 0, %s34
      %s56 = sphi 0, %s58
      %s59 = sphi 0, %s56
      %s60 = sphi 0, %s59
      %s76 = sphi 0, %s60
      %s82 = sphi 0, %s84
      %s85 = sphi 0, %s82
      %s86 = sphi 0, %s85
      %s102 = sphi 0, %s86
      %s106 = sphi 0, %s106
      %s108 = sphi 0, %s106
      %s109 = sphi 0, %s108
      %s123 = sphi 0, %s109
      %s127 = sphi 0, %s127
      %s129 = sphi 0, %s127
      %s130 = sphi 0, %s129
      %s144 = sphi 0, %s130
      %s148 = sphi 0, %s148
      %s150 = sphi 0, %s148
      %s151 = sphi 0, %s150
      %s165 = sphi 0, %s151
      %s169 = sphi 0, %s169
      %s171 = sphi 0, %s169
      %s172 = sphi 0, %s171
      %s186 = sphi 0, %s172
      %s190 = sphi 0, %s190
      %s192 = sphi 0, %s190
      %s193 = sphi 0, %s192
      %s207 = sphi 0, %s193
      %s211 = sphi 0, %s211
      %s213 = sphi 0, %s211
      %s214 = sphi 0, %s213
      %s228 = sphi 0, %s214
      %s232 = sphi 0, %s232
      %s234 = sphi 0, %s232
      %s235 = sphi 0, %s234
      %s249 = sphi 0, %s235
      %s253 = sphi 0, %s253
      %s255 = sphi 0, %s253
      %s256 = sphi 0, %s255
      %s270 = sphi 0, %s256
      %s276 = sphi 0, %s278
      %s279 = sphi 0, %s276
      %s280 = sphi 0, %s279
      %s296 = sphi 0, %s280
    $region4: #{tpu_custom_call.1} parent=1 // loop_header_branch
      %23 = sbr.rel (%p21) target = $region8
    $region5: #{tpu_custom_call.1} parent=1 // loop_body
      %s25 = ssub.s32 %s20, 1
      %s26 = ssub.s32 %s20, 2
      %s27 = sadd.s32 %s20, 1
      %s28 = ssub.s32 %s20, %s27
      %p29 = scmp.eq.s32.totalorder %s28, 0
      %s31 = sadd.s32 %s30, 1
      %s32 = scalar_select %p29, %s30, %s31
      %p35 = pneg %p29
      %p36 = scmp.eq.s32.totalorder %s20, 1
      %p37 = por %p35, %p36
      %p38 = scmp.ne.s32.totalorder %s30, %s33
      %p39 = scmp.eq.s32.totalorder %s20, 0
      %p40 = por %p38, %p39
      %p41 = scmp.ne.s32.totalorder %s30, %s33
      %p42 = scmp.eq.s32.totalorder %s25, 1
      %p43 = por %p41, %p42
      %p44 = scmp.ne.s32.totalorder %s33, %s34
      %p45 = scmp.eq.s32.totalorder %s25, 0
      %p46 = por %p44, %p45
      %p47 = scmp.ne.s32.totalorder %s33, %s34
      %p48 = scmp.eq.s32.totalorder %s26, 1
      %p49 = por %p47, %p48
      %p51 = scmp.ne.s32.totalorder %s34, %s50
      %p52 = scmp.eq.s32.totalorder %s26, 0
      %p53 = por %p51, %p52
      %s54 = ssub.s32 %s20, %s27
      %p55 = scmp.eq.s32.totalorder %s54, 0
      %s57 = sadd.s32 %s56, 1
      %s58 = scalar_select %p55, %s56, %s57
      %p61 = pneg %p55
      %p62 = scmp.eq.s32.totalorder %s20, 1
      %p63 = por %p61, %p62
      %p64 = scmp.ne.s32.totalorder %s56, %s59
      %p65 = scmp.eq.s32.totalorder %s20, 0
      %p66 = por %p64, %p65
      %p67 = scmp.ne.s32.totalorder %s56, %s59
      %p68 = scmp.eq.s32.totalorder %s25, 1
      %p69 = por %p67, %p68
      %p70 = scmp.ne.s32.totalorder %s59, %s60
      %p71 = scmp.eq.s32.totalorder %s25, 0
      %p72 = por %p70, %p71
      %p73 = scmp.ne.s32.totalorder %s59, %s60
      %p74 = scmp.eq.s32.totalorder %s26, 1
      %p75 = por %p73, %p74
      %p77 = scmp.ne.s32.totalorder %s60, %s76
      %p78 = scmp.eq.s32.totalorder %s26, 0
      %p79 = por %p77, %p78
      %s80 = ssub.s32 %s20, %s27
      %p81 = scmp.eq.s32.totalorder %s80, 0
      %s83 = sadd.s32 %s82, 1
      %s84 = scalar_select %p81, %s82, %s83
      %p87 = pneg %p81
      %p88 = scmp.eq.s32.totalorder %s20, 1
      %p89 = por %p87, %p88
      %p90 = scmp.ne.s32.totalorder %s82, %s85
      %p91 = scmp.eq.s32.totalorder %s20, 0
      %p92 = por %p90, %p91
      %p93 = scmp.ne.s32.totalorder %s82, %s85
      %p94 = scmp.eq.s32.totalorder %s25, 1
      %p95 = por %p93, %p94
      %p96 = scmp.ne.s32.totalorder %s85, %s86
      %p97 = scmp.eq.s32.totalorder %s25, 0
      %p98 = por %p96, %p97
      %p99 = scmp.ne.s32.totalorder %s85, %s86
      %p100 = scmp.eq.s32.totalorder %s26, 1
      %p101 = por %p99, %p100
      %p103 = scmp.ne.s32.totalorder %s86, %s102
      %p104 = scmp.eq.s32.totalorder %s26, 0
      %p105 = por %p103, %p104
      %s107 = sadd.s32 %s106, 1
      %p110 = scmp.eq.s32.totalorder %s20, 1
      %p111 = scmp.ne.s32.totalorder %s106, %s108
      %p112 = scmp.eq.s32.totalorder %s20, 0
      %p113 = por %p111, %p112
      %p114 = scmp.ne.s32.totalorder %s106, %s108
      %p115 = scmp.eq.s32.totalorder %s25, 1
      %p116 = por %p114, %p115
      %p117 = scmp.ne.s32.totalorder %s108, %s109
      %p118 = scmp.eq.s32.totalorder %s25, 0
      %p119 = por %p117, %p118
      %p120 = scmp.ne.s32.totalorder %s108, %s109
      %p121 = scmp.eq.s32.totalorder %s26, 1
      %p122 = por %p120, %p121
      %p124 = scmp.ne.s32.totalorder %s109, %s123
      %p125 = scmp.eq.s32.totalorder %s26, 0
      %p126 = por %p124, %p125
      %s128 = sadd.s32 %s127, 1
      %p131 = scmp.eq.s32.totalorder %s20, 1
      %p132 = scmp.ne.s32.totalorder %s127, %s129
      %p133 = scmp.eq.s32.totalorder %s20, 0
      %p134 = por %p132, %p133
      %p135 = scmp.ne.s32.totalorder %s127, %s129
      %p136 = scmp.eq.s32.totalorder %s25, 1
      %p137 = por %p135, %p136
      %p138 = scmp.ne.s32.totalorder %s129, %s130
      %p139 = scmp.eq.s32.totalorder %s25, 0
      %p140 = por %p138, %p139
      %p141 = scmp.ne.s32.totalorder %s129, %s130
      %p142 = scmp.eq.s32.totalorder %s26, 1
      %p143 = por %p141, %p142
      %p145 = scmp.ne.s32.totalorder %s130, %s144
      %p146 = scmp.eq.s32.totalorder %s26, 0
      %p147 = por %p145, %p146
      %s149 = sadd.s32 %s148, 1
      %p152 = scmp.eq.s32.totalorder %s20, 1
      %p153 = scmp.ne.s32.totalorder %s148, %s150
      %p154 = scmp.eq.s32.totalorder %s20, 0
      %p155 = por %p153, %p154
      %p156 = scmp.ne.s32.totalorder %s148, %s150
      %p157 = scmp.eq.s32.totalorder %s25, 1
      %p158 = por %p156, %p157
      %p159 = scmp.ne.s32.totalorder %s150, %s151
      %p160 = scmp.eq.s32.totalorder %s25, 0
      %p161 = por %p159, %p160
      %p162 = scmp.ne.s32.totalorder %s150, %s151
      %p163 = scmp.eq.s32.totalorder %s26, 1
      %p164 = por %p162, %p163
      %p166 = scmp.ne.s32.totalorder %s151, %s165
      %p167 = scmp.eq.s32.totalorder %s26, 0
      %p168 = por %p166, %p167
      %s170 = sadd.s32 %s169, 1
      %p173 = scmp.eq.s32.totalorder %s20, 1
      %p174 = scmp.ne.s32.totalorder %s169, %s171
      %p175 = scmp.eq.s32.totalorder %s20, 0
      %p176 = por %p174, %p175
      %p177 = scmp.ne.s32.totalorder %s169, %s171
      %p178 = scmp.eq.s32.totalorder %s25, 1
      %p179 = por %p177, %p178
      %p180 = scmp.ne.s32.totalorder %s171, %s172
      %p181 = scmp.eq.s32.totalorder %s25, 0
      %p182 = por %p180, %p181
      %p183 = scmp.ne.s32.totalorder %s171, %s172
      %p184 = scmp.eq.s32.totalorder %s26, 1
      %p185 = por %p183, %p184
      %p187 = scmp.ne.s32.totalorder %s172, %s186
      %p188 = scmp.eq.s32.totalorder %s26, 0
      %p189 = por %p187, %p188
      %s191 = sadd.s32 %s190, 1
      %p194 = scmp.eq.s32.totalorder %s20, 1
      %p195 = scmp.ne.s32.totalorder %s190, %s192
      %p196 = scmp.eq.s32.totalorder %s20, 0
      %p197 = por %p195, %p196
      %p198 = scmp.ne.s32.totalorder %s190, %s192
      %p199 = scmp.eq.s32.totalorder %s25, 1
      %p200 = por %p198, %p199
      %p201 = scmp.ne.s32.totalorder %s192, %s193
      %p202 = scmp.eq.s32.totalorder %s25, 0
      %p203 = por %p201, %p202
      %p204 = scmp.ne.s32.totalorder %s192, %s193
      %p205 = scmp.eq.s32.totalorder %s26, 1
      %p206 = por %p204, %p205
      %p208 = scmp.ne.s32.totalorder %s193, %s207
      %p209 = scmp.eq.s32.totalorder %s26, 0
      %p210 = por %p208, %p209
      %s212 = sadd.s32 %s211, 1
      %p215 = scmp.eq.s32.totalorder %s20, 1
      %p216 = scmp.ne.s32.totalorder %s211, %s213
      %p217 = scmp.eq.s32.totalorder %s20, 0
      %p218 = por %p216, %p217
      %p219 = scmp.ne.s32.totalorder %s211, %s213
      %p220 = scmp.eq.s32.totalorder %s25, 1
      %p221 = por %p219, %p220
      %p222 = scmp.ne.s32.totalorder %s213, %s214
      %p223 = scmp.eq.s32.totalorder %s25, 0
      %p224 = por %p222, %p223
      %p225 = scmp.ne.s32.totalorder %s213, %s214
      %p226 = scmp.eq.s32.totalorder %s26, 1
      %p227 = por %p225, %p226
      %p229 = scmp.ne.s32.totalorder %s214, %s228
      %p230 = scmp.eq.s32.totalorder %s26, 0
      %p231 = por %p229, %p230
      %s233 = sadd.s32 %s232, 1
      %p236 = scmp.eq.s32.totalorder %s20, 1
      %p237 = scmp.ne.s32.totalorder %s232, %s234
      %p238 = scmp.eq.s32.totalorder %s20, 0
      %p239 = por %p237, %p238
      %p240 = scmp.ne.s32.totalorder %s232, %s234
      %p241 = scmp.eq.s32.totalorder %s25, 1
      %p242 = por %p240, %p241
      %p243 = scmp.ne.s32.totalorder %s234, %s235
      %p244 = scmp.eq.s32.totalorder %s25, 0
      %p245 = por %p243, %p244
      %p246 = scmp.ne.s32.totalorder %s234, %s235
      %p247 = scmp.eq.s32.totalorder %s26, 1
      %p248 = por %p246, %p247
      %p250 = scmp.ne.s32.totalorder %s235, %s249
      %p251 = scmp.eq.s32.totalorder %s26, 0
      %p252 = por %p250, %p251
      %s254 = sadd.s32 %s253, 1
      %p257 = scmp.eq.s32.totalorder %s20, 1
      %p258 = scmp.ne.s32.totalorder %s253, %s255
      %p259 = scmp.eq.s32.totalorder %s20, 0
      %p260 = por %p258, %p259
      %p261 = scmp.ne.s32.totalorder %s253, %s255
      %p262 = scmp.eq.s32.totalorder %s25, 1
      %p263 = por %p261, %p262
      %p264 = scmp.ne.s32.totalorder %s255, %s256
      %p265 = scmp.eq.s32.totalorder %s25, 0
      %p266 = por %p264, %p265
      %p267 = scmp.ne.s32.totalorder %s255, %s256
      %p268 = scmp.eq.s32.totalorder %s26, 1
      %p269 = por %p267, %p268
      %p271 = scmp.ne.s32.totalorder %s256, %s270
      %p272 = scmp.eq.s32.totalorder %s26, 0
      %p273 = por %p271, %p272
      %s274 = ssub.s32 %s20, %s27
      %p275 = scmp.eq.s32.totalorder %s274, 0
      %s277 = sadd.s32 %s276, 1
      %s278 = scalar_select %p275, %s276, %s277
      %p281 = pneg %p275
      %p282 = scmp.eq.s32.totalorder %s20, 1
      %p283 = por %p281, %p282
      %p284 = scmp.ne.s32.totalorder %s276, %s279
      %p285 = scmp.eq.s32.totalorder %s20, 0
      %p286 = por %p284, %p285
      %p287 = scmp.ne.s32.totalorder %s276, %s279
      %p288 = scmp.eq.s32.totalorder %s25, 1
      %p289 = por %p287, %p288
      %p290 = scmp.ne.s32.totalorder %s279, %s280
      %p291 = scmp.eq.s32.totalorder %s25, 0
      %p292 = por %p290, %p291
      %p293 = scmp.ne.s32.totalorder %s279, %s280
      %p294 = scmp.eq.s32.totalorder %s26, 1
      %p295 = por %p293, %p294
      %p297 = scmp.ne.s32.totalorder %s280, %s296
      %p298 = scmp.eq.s32.totalorder %s26, 0
      %p299 = por %p297, %p298
      %p300 = scmp.le.s32.totalorder 1, %s20
      %p301 = scmp.lt.s32.totalorder %s20, 3
      %p302 = pnand %p300, %p301
      %p303 = pneg %p302
      // Predicated region
      $region9: #{tpu_custom_call.1} parent=5 // pred_check
        _
      $region10: #{tpu_custom_call.1} parent=5 // pred_check_branch
        %305 = sbr.rel (%p302) target = $region12
      $region11: #{tpu_custom_call.1} parent=5 // pred_region
        %s306 = ssub.s32 %s20, 1
        // Predicated region
        $region13: #{tpu_custom_call.1} parent=11 // pred_check
          %p307 = pneg %p119
        $region14: #{tpu_custom_call.1} parent=11 // pred_check_branch
          %309 = sbr.rel (%p307) target = $region16
        $region15: #{tpu_custom_call.1} parent=11 // pred_region
          _
        $region16: #{tpu_custom_call.1} parent=11 // pred_fallthru
          _
        // Predicated region
        $region17: #{tpu_custom_call.1} parent=11 // pred_check
          %p310 = pneg %p140
        $region18: #{tpu_custom_call.1} parent=11 // pred_check_branch
          %312 = sbr.rel (%p310) target = $region20
        $region19: #{tpu_custom_call.1} parent=11 // pred_region
          _
        $region20: #{tpu_custom_call.1} parent=11 // pred_fallthru
          _
        // Predicated region
        $region21: #{tpu_custom_call.1} parent=11 // pred_check
          %p313 = pneg %p161
        $region22: #{tpu_custom_call.1} parent=11 // pred_check_branch
          %315 = sbr.rel (%p313) target = $region24
        $region23: #{tpu_custom_call.1} parent=11 // pred_region
          _
        $region24: #{tpu_custom_call.1} parent=11 // pred_fallthru
          _
        // Predicated region
        $region25: #{tpu_custom_call.1} parent=11 // pred_check
          %p316 = pneg %p182
        $region26: #{tpu_custom_call.1} parent=11 // pred_check_branch
          %318 = sbr.rel (%p316) target = $region28
        $region27: #{tpu_custom_call.1} parent=11 // pred_region
          _
        $region28: #{tpu_custom_call.1} parent=11 // pred_fallthru
          _
        // Predicated region
        $region29: #{tpu_custom_call.1} parent=11 // pred_check
          %p319 = pneg %p203
        $region30: #{tpu_custom_call.1} parent=11 // pred_check_branch
          %321 = sbr.rel (%p319) target = $region32
        $region31: #{tpu_custom_call.1} parent=11 // pred_region
          _
        $region32: #{tpu_custom_call.1} parent=11 // pred_fallthru
          _
        // Predicated region
        $region33: #{tpu_custom_call.1} parent=11 // pred_check
          %p322 = pneg %p224
        $region34: #{tpu_custom_call.1} parent=11 // pred_check_branch
          %324 = sbr.rel (%p322) target = $region36
        $region35: #{tpu_custom_call.1} parent=11 // pred_region
          _
        $region36: #{tpu_custom_call.1} parent=11 // pred_fallthru
          _
        // Predicated region
        $region37: #{tpu_custom_call.1} parent=11 // pred_check
          %p325 = pneg %p245
        $region38: #{tpu_custom_call.1} parent=11 // pred_check_branch
          %327 = sbr.rel (%p325) target = $region40
        $region39: #{tpu_custom_call.1} parent=11 // pred_region
          _
        $region40: #{tpu_custom_call.1} parent=11 // pred_fallthru
          _
        // Predicated region
        $region41: #{tpu_custom_call.1} parent=11 // pred_check
          %p328 = pneg %p266
        $region42: #{tpu_custom_call.1} parent=11 // pred_check_branch
          %330 = sbr.rel (%p328) target = $region44
        $region43: #{tpu_custom_call.1} parent=11 // pred_region
          _
        $region44: #{tpu_custom_call.1} parent=11 // pred_fallthru
          _
      $region12: #{tpu_custom_call.1} parent=5 // pred_fallthru
        _
      %p331 = scmp.lt.s32.totalorder %s20, 2
      // Predicated region
      $region45: #{tpu_custom_call.1} parent=5 // pred_check
        %p332 = pneg %p331
      $region46: #{tpu_custom_call.1} parent=5 // pred_check_branch
        %334 = sbr.rel (%p332) target = $region48
      $region47: #{tpu_custom_call.1} parent=5 // pred_region
        // Predicated region
        $region49: #{tpu_custom_call.1} parent=47 // pred_check
          %p335 = pneg %p40
        $region50: #{tpu_custom_call.1} parent=47 // pred_check_branch
          %337 = sbr.rel (%p335) target = $region52
        $region51: #{tpu_custom_call.1} parent=47 // pred_region
          %s338 = sand.u32 %s30, 1
          %s339 = sand.u32 %s30, 1
          %s340 = smul.addr %s339, 32
          %s341 = scalar_lea.vmem [#allocation2], %s340
          %s342 = smul.u32 2, %s20
          %s343 = smul.addr %s342, 8
          %s344 = scalar_lea.vmem %s0, %s343
          // Predicated region
          $region53: #{tpu_custom_call.1} parent=51 // pred_check
            _
          $region54: #{tpu_custom_call.1} parent=51 // pred_check_branch
            %346 = sbr.rel (0) target = $region56
          $region55: #{tpu_custom_call.1} parent=51 // pred_region
            // Predicated region
            $region57: #{tpu_custom_call.1} parent=55 // pred_check
              _
            $region58: #{tpu_custom_call.1} parent=55 // pred_check_branch
              %348 = sbr.rel (0) target = $region60
            $region59: #{tpu_custom_call.1} parent=55 // pred_region
              loop: start=0, step=1, limit=1
              $region61: #{tpu_custom_call.1} parent=59 // loop_pre_header
                _
              $region62: #{tpu_custom_call.1} parent=59 // loop_header
                %s350 = sphi 0, %s354
                %p351 = scmp.ge.s32.totalorder %s350, 1
                %s355 = sphi %s344, %s344
                %s356 = sphi %s341, %s341
              $region63: #{tpu_custom_call.1} parent=59 // loop_header_branch
                %353 = sbr.rel (%p351) target = $region67
              $region64: #{tpu_custom_call.1} parent=59 // loop_body
                %v357 = vld [vmem:[%s355] sm:$0xff]
                %358 = vst [vmem:[%s356] sm:$0xff] %v357
                %v359 = vld [vmem:[%s355 + $0x8] sm:$0xff]
                %360 = vst [vmem:[%s356 + $0x8] sm:$0xff] %v359
                %v361 = vld [vmem:[%s355 + $0x20] sm:$0xff]
                %362 = vst [vmem:[%s356 + $0x10] sm:$0xff] %v361
                %v363 = vld [vmem:[%s355 + $0x28] sm:$0xff]
                %364 = vst [vmem:[%s356 + $0x18] sm:$0xff] %v363
              $region65: #{tpu_custom_call.1} parent=59 // loop_footer
                %s354 = sadd.s32 1, %s350
              $region66: #{tpu_custom_call.1} parent=59 // loop_footer_branch
                %349 = sbr.rel target = $region62
              $region67: #{tpu_custom_call.1} parent=59 // loop_exit
                _
            $region60: #{tpu_custom_call.1} parent=55 // pred_fallthru
              _
            // Predicated region
            $region68: #{tpu_custom_call.1} parent=55 // pred_check
              _
            $region69: #{tpu_custom_call.1} parent=55 // pred_check_branch
              %366 = sbr.rel target = $region71
            $region70: #{tpu_custom_call.1} parent=55 // pred_region
              _
            $region71: #{tpu_custom_call.1} parent=55 // pred_fallthru
              _
          $region56: #{tpu_custom_call.1} parent=51 // pred_fallthru
            _
          %367 = vnop
        $region52: #{tpu_custom_call.1} parent=47 // pred_fallthru
          _
        // Predicated region
        $region72: #{tpu_custom_call.1} parent=47 // pred_check
          %p368 = pneg %p66
        $region73: #{tpu_custom_call.1} parent=47 // pred_check_branch
          %370 = sbr.rel (%p368) target = $region75
        $region74: #{tpu_custom_call.1} parent=47 // pred_region
          %s371 = smul.u32 2, %s20
          %p372 = scmp.lt.s32.totalorder %s371, 3
          %s373 = scalar_select %p372, %s371, 3
          %s374 = scalar_lea.vmem %s1, %s373
          %s375 = smul.u32 2, %s20
        $region75: #{tpu_custom_call.1} parent=47 // pred_fallthru
          _
        // Predicated region
        $region76: #{tpu_custom_call.1} parent=47 // pred_check
          %p376 = pneg %p92
        $region77: #{tpu_custom_call.1} parent=47 // pred_check_branch
          %378 = sbr.rel (%p376) target = $region79
        $region78: #{tpu_custom_call.1} parent=47 // pred_region
          %s379 = smul.u32 2, %s20
          %p380 = scmp.lt.s32.totalorder %s379, 3
          %s381 = scalar_select %p380, %s379, 3
          %s382 = scalar_lea.vmem %s2, %s381
          %s383 = smul.u32 2, %s20
        $region79: #{tpu_custom_call.1} parent=47 // pred_fallthru
          _
      $region48: #{tpu_custom_call.1} parent=5 // pred_fallthru
        _
      %p384 = scmp.le.s32.totalorder 1, %s20
      %p385 = scmp.lt.s32.totalorder %s20, 3
      %p386 = pnand %p384, %p385
      %p387 = pneg %p386
      // Predicated region
      $region80: #{tpu_custom_call.1} parent=5 // pred_check
        _
      $region81: #{tpu_custom_call.1} parent=5 // pred_check_branch
        %389 = sbr.rel (%p386) target = $region83
      $region82: #{tpu_custom_call.1} parent=5 // pred_region
        %s390 = ssub.s32 %s20, 1
        %s391 = sand.u32 %s33, 1
        %s392 = sand.u32 %s33, 1
        %s393 = smul.addr %s392, 32
        %s394 = scalar_lea.vmem [#allocation2], %s393
        // Predicated region
        $region84: #{tpu_custom_call.1} parent=82 // pred_check
          %p395 = pneg %p46
        $region85: #{tpu_custom_call.1} parent=82 // pred_check_branch
          %397 = sbr.rel (%p395) target = $region87
        $region86: #{tpu_custom_call.1} parent=82 // pred_region
          _
        $region87: #{tpu_custom_call.1} parent=82 // pred_fallthru
          _
        %s398 = sand.u32 %s33, 1
        %s399 = sand.u32 %s33, 1
        %s400 = smul.addr %s399, 32
        %s401 = scalar_lea.vmem [#allocation2], %s400
        %p402 = pneg %p46
        %p403 = pneg %p43
        %s404 = smul.u32 2, %s25
        %p405 = scmp.lt.s32.totalorder %s404, 3
        %s406 = scalar_select %p405, %s404, 3
        %s407 = scalar_lea.vmem %s1, %s406
        %p408 = pneg %p72
        %p409 = pneg %p69
        %s410 = smul.u32 2, %s25
        %p411 = scmp.lt.s32.totalorder %s410, 3
        %s412 = scalar_select %p411, %s410, 3
        %s413 = scalar_lea.vmem %s2, %s412
        %p414 = pneg %p98
        %p415 = pneg %p95
        %p416 = pneg %p119
        %p417 = pneg %p116
        %p418 = pneg %p140
        %p419 = pneg %p137
        %p420 = pneg %p161
        %p421 = pneg %p158
        %p422 = pneg %p182
        %p423 = pneg %p179
        %p424 = pneg %p203
        %p425 = pneg %p200
        %p426 = pneg %p224
        %p427 = pneg %p221
        %p428 = pneg %p245
        %p429 = pneg %p242
        %p430 = pneg %p266
        %p431 = pneg %p263
        %p432 = pneg %p292
        %p433 = pneg %p289
        %s434 = sand.u32 %s279, 1
        %s435 = scalar_lea.sflag [#allocation4], %s434
        %s436 = sand.u32 %s279, 1
        %s437 = smul.addr %s436, 16
        %s438 = scalar_lea.vmem [#allocation3], %s437
        %s439 = smul.u32 2, %s25
        %s440 = smul.u32 2, %s25
        %p441 = scmp.lt.s32.totalorder %s440, 3
        %s442 = scalar_select %p441, %s440, 3
        %s443 = scalar_lea.vmem %s1, %s442
        %s444 = smul.u32 2, %s25
        %s445 = smul.u32 2, %s25
        %p446 = scmp.lt.s32.totalorder %s445, 3
        %s447 = scalar_select %p446, %s445, 3
        %s448 = scalar_lea.vmem %s2, %s447
        %s449 = smul.u32 2, %s25
        %s450 = smul.u32 2, %s25
        %v451 = vld [vmem:[%s394] sm:$0xff]
        %v452 = vld [vmem:[%s394 + $0x8] sm:$0xff]
        %v453 = vld [vmem:[%s394 + $0x10] sm:$0xff]
        %v454 = vld [vmem:[%s394 + $0x18] sm:$0xff]
        %v455 = vld [vmem:[%s443] sm:$0x3]
        %v456 = vld [vmem:[%s448] sm:$0x3]
        %v457 = vld [vmem:[%s3] sm:$0xff]
        %v458 = vld [vmem:[%s3 + $0x8] sm:$0xff]
        %v459 = vld [vmem:[%s3 + $0x10] sm:$0xff]
        %v460 = vld [vmem:[%s3 + $0x18] sm:$0xff]
        %v461 = vld [vmem:[%s4] sm:$0xff]
        %v462 = vld [vmem:[%s4 + $0x8] sm:$0xff]
        %v463 = vld [vmem:[%s4 + $0x10] sm:$0xff]
        %v464 = vld [vmem:[%s4 + $0x18] sm:$0xff]
        %466 = vset.pattern.permute.xlu0 0
        %467 = vperm.xlu0 %466, %v461
        %v468 = vpop.permute.xlu0 %467
        %471 = vset.pattern.permute.xlu0 0
        %472 = vperm.xlu0 %471, %v462
        %v473 = vpop.permute.xlu0 %472
        %476 = vset.pattern.permute.xlu0 0
        %477 = vperm.xlu0 %476, %v463
        %v478 = vpop.permute.xlu0 %477
        %481 = vset.pattern.permute.xlu0 0
        %482 = vperm.xlu0 %481, %v464
        %v483 = vpop.permute.xlu0 %482
        %vm485 = vcmask 130048
        %v487 = vsel %vm485, %v457, 0
        %v490 = vsel %vm485, %v458, 0
        %v493 = vsel %vm485, %v459, 0
        %v496 = vsel %vm485, %v460, 0
        %498 = vmatpush.msra.mxu0 0.0
        %499 = vmatpush.msra.mxu0 0.0
        %500 = vmatpush.msra.mxu0 0.0
        %501 = vmatpush.msra.mxu0 0.0
        %502 = vmatpush.msra.mxu0 0.0
        %503 = vmatpush.msra.mxu0 0.0
        %504 = vmatpush.msra.mxu0 0.0
        %505 = vmatpush.msra.mxu0 0.0
        %506 = vmatpush.msra.mxu0 0.0
        %507 = vmatpush.msra.mxu0 0.0
        %508 = vmatpush.msra.mxu0 0.0
        %509 = vmatpush.msra.mxu0 0.0
        %510 = vmatpush.msra.mxu0 0.0
        %511 = vmatpush.msra.mxu0 0.0
        %512 = vmatpush.msra.mxu0 %v453
        %513 = vmatpush.msra.mxu0 %v451
        %514 = vmatmul.f32.gmra.mxu0 %v487
        %v515 = vpop.f32.mrf.mxu0
        %v516 = vadd.f32 %v468, %v515
        %517 = vmatmul.f32.gmra.mxu0 %v490
        %v518 = vpop.f32.mrf.mxu0
        %v519 = vadd.f32 %v473, %v518
        %520 = vmatmul.f32.gmra.mxu0 %v493
        %v521 = vpop.f32.mrf.mxu0
        %v522 = vadd.f32 %v478, %v521
        %523 = vmatmul.f32.gmra.mxu0 %v496
        %v524 = vpop.f32.mrf.mxu0
        %v525 = vadd.f32 %v483, %v524
        %526 = vdwg.mxu0
        %527 = vmatpush.msra.mxu0 0.0
        %528 = vmatpush.msra.mxu0 0.0
        %529 = vmatpush.msra.mxu0 0.0
        %530 = vmatpush.msra.mxu0 0.0
        %531 = vmatpush.msra.mxu0 0.0
        %532 = vmatpush.msra.mxu0 0.0
        %533 = vmatpush.msra.mxu0 0.0
        %534 = vmatpush.msra.mxu0 0.0
        %535 = vmatpush.msra.mxu0 0.0
        %536 = vmatpush.msra.mxu0 0.0
        %537 = vmatpush.msra.mxu0 0.0
        %538 = vmatpush.msra.mxu0 0.0
        %539 = vmatpush.msra.mxu0 0.0
        %540 = vmatpush.msra.mxu0 0.0
        %541 = vmatpush.msra.mxu0 %v454
        %542 = vmatpush.msra.mxu0 %v452
        %543 = vmatmul.f32.gmra.mxu0 %v487
        %v544 = vpop.f32.mrf.mxu0
        %v545 = vadd.f32 %v468, %v544
        %546 = vmatmul.f32.gmra.mxu0 %v490
        %v547 = vpop.f32.mrf.mxu0
        %v548 = vadd.f32 %v473, %v547
        %549 = vmatmul.f32.gmra.mxu0 %v493
        %v550 = vpop.f32.mrf.mxu0
        %v551 = vadd.f32 %v478, %v550
        %552 = vmatmul.f32.gmra.mxu0 %v496
        %v553 = vpop.f32.mrf.mxu0
        %v554 = vadd.f32 %v483, %v553
        %555 = vdwg.mxu0
        %vm556 = vcmp.ge.s32.totalorder %v456, 1
        %561 = vrot.lane.b32.xlu0 %v545, 1
        %v562 = vpop.permute.xlu0 %561
        %563 = vrot.lane.b32.xlu0 %v548, 1
        %v564 = vpop.permute.xlu0 %563
        %565 = vrot.lane.b32.xlu0 %v551, 1
        %v566 = vpop.permute.xlu0 %565
        %567 = vrot.lane.b32.xlu0 %v554, 1
        %v568 = vpop.permute.xlu0 %567
        %577 = vrot.lane.b32.xlu0 %v516, 1
        %v578 = vpop.permute.xlu0 %577
        %579 = vrot.lane.b32.xlu0 %v519, 1
        %v580 = vpop.permute.xlu0 %579
        %581 = vrot.lane.b32.xlu0 %v522, 1
        %v582 = vpop.permute.xlu0 %581
        %583 = vrot.lane.b32.xlu0 %v525, 1
        %v584 = vpop.permute.xlu0 %583
        %vm585 = vcmask 7168
        %v586 = vsel %vm585, %v578, %v562
        %v587 = vsel %vm585, %v580, %v564
        %v588 = vsel %vm585, %v582, %v566
        %v589 = vsel %vm585, %v584, %v568
        %v598 = vsel %vm585, %v562, %v578
        %v599 = vsel %vm585, %v564, %v580
        %v600 = vsel %vm585, %v566, %v582
        %v601 = vsel %vm585, %v568, %v584
        %v602 = vsel %vm556, 1, 0
        %v603 = vperm.slane %v602, 0
        %v604 = vperm.slane %v602, 1
        %vm605 = vcmp.eq.s32.totalorder %v603, 1
        %vm606 = vcmp.eq.s32.totalorder %v604, 1
        %v607 = vsel %vm605, %v598, 0.0
        %v608 = vsel %vm606, %v586, 0.0
        %v609 = vsel %vm605, %v599, 0.0
        %v610 = vsel %vm606, %v587, 0.0
        %v611 = vsel %vm605, %v600, 0.0
        %v612 = vsel %vm606, %v588, 0.0
        %v613 = vsel %vm605, %v601, 0.0
        %v614 = vsel %vm606, %v589, 0.0
        %vm615 = vcmp.lt.s32.totalorder %v456, 99
        %616 = vrot.lane.b32.xlu0 %v516, 127
        %v617 = vpop.permute.xlu0 %616
        %618 = vrot.lane.b32.xlu0 %v545, 127
        %v619 = vpop.permute.xlu0 %618
        %620 = vrot.lane.b32.xlu0 %v519, 127
        %v621 = vpop.permute.xlu0 %620
        %622 = vrot.lane.b32.xlu0 %v548, 127
        %v623 = vpop.permute.xlu0 %622
        %624 = vrot.lane.b32.xlu0 %v522, 127
        %v625 = vpop.permute.xlu0 %624
        %626 = vrot.lane.b32.xlu0 %v551, 127
        %v627 = vpop.permute.xlu0 %626
        %628 = vrot.lane.b32.xlu0 %v525, 127
        %v629 = vpop.permute.xlu0 %628
        %630 = vrot.lane.b32.xlu0 %v554, 127
        %v631 = vpop.permute.xlu0 %630
        %vm632 = vcmask 1039360
        %v633 = vsel %vm632, %v617, %v619
        %v634 = vsel %vm632, %v621, %v623
        %v635 = vsel %vm632, %v625, %v627
        %v636 = vsel %vm632, %v629, %v631
        %v649 = vsel %vm632, %v619, %v617
        %v650 = vsel %vm632, %v623, %v621
        %v651 = vsel %vm632, %v627, %v625
        %v652 = vsel %vm632, %v631, %v629
        %v653 = vsel %vm615, 1, 0
        %v654 = vperm.slane %v653, 0
        %v655 = vperm.slane %v653, 1
        %vm656 = vcmp.eq.s32.totalorder %v654, 1
        %vm657 = vcmp.eq.s32.totalorder %v655, 1
        %v658 = vsel %vm656, %v633, 0.0
        %v659 = vsel %vm657, %v649, 0.0
        %v660 = vsel %vm656, %v634, 0.0
        %v661 = vsel %vm657, %v650, 0.0
        %v662 = vsel %vm656, %v635, 0.0
        %v663 = vsel %vm657, %v651, 0.0
        %v664 = vsel %vm656, %v636, 0.0
        %v665 = vsel %vm657, %v652, 0.0
        %v666 = vld [vmem:[%s5] sm:$0xff]
        %v667 = vld [vmem:[%s5 + $0x8] sm:$0xff]
        %v668 = vld [vmem:[%s5 + $0x10] sm:$0xff]
        %v669 = vld [vmem:[%s5 + $0x18] sm:$0xff]
        %v670 = vld [vmem:[%s6] sm:$0xff]
        %v671 = vld [vmem:[%s6 + $0x8] sm:$0xff]
        %v672 = vld [vmem:[%s6 + $0x10] sm:$0xff]
        %v673 = vld [vmem:[%s6 + $0x18] sm:$0xff]
        %675 = vset.pattern.permute.xlu0 0
        %676 = vperm.xlu0 %675, %v670
        %v677 = vpop.permute.xlu0 %676
        %680 = vset.pattern.permute.xlu0 0
        %681 = vperm.xlu0 %680, %v671
        %v682 = vpop.permute.xlu0 %681
        %685 = vset.pattern.permute.xlu0 0
        %686 = vperm.xlu0 %685, %v672
        %v687 = vpop.permute.xlu0 %686
        %690 = vset.pattern.permute.xlu0 0
        %691 = vperm.xlu0 %690, %v673
        %v692 = vpop.permute.xlu0 %691
        %vm694 = vcmask 785408
        %v696 = vsel %vm694, %v666, 0
        %v699 = vsel %vm694, %v667, 0
        %v702 = vsel %vm694, %v668, 0
        %v705 = vsel %vm694, %v669, 0
        %707 = vmatpush.msra.mxu0 0.0
        %708 = vmatpush.msra.mxu0 0.0
        %709 = vmatpush.msra.mxu0 0.0
        %710 = vmatpush.msra.mxu0 0.0
        %711 = vmatpush.msra.mxu0 %v664
        %712 = vmatpush.msra.mxu0 %v662
        %713 = vmatpush.msra.mxu0 %v660
        %714 = vmatpush.msra.mxu0 %v658
        %715 = vmatpush.msra.mxu0 %v525
        %716 = vmatpush.msra.mxu0 %v522
        %717 = vmatpush.msra.mxu0 %v519
        %718 = vmatpush.msra.mxu0 %v516
        %719 = vmatpush.msra.mxu0 %v613
        %720 = vmatpush.msra.mxu0 %v611
        %721 = vmatpush.msra.mxu0 %v609
        %722 = vmatpush.msra.mxu0 %v607
        %723 = vmatmul.f32.gmra.mxu0 %v696
        %v724 = vpop.f32.mrf.mxu0
        %v725 = vadd.f32 %v677, %v724
        %726 = vmatmul.f32.gmra.mxu0 %v699
        %v727 = vpop.f32.mrf.mxu0
        %v728 = vadd.f32 %v682, %v727
        %729 = vmatmul.f32.gmra.mxu0 %v702
        %v730 = vpop.f32.mrf.mxu0
        %v731 = vadd.f32 %v687, %v730
        %732 = vmatmul.f32.gmra.mxu0 %v705
        %v733 = vpop.f32.mrf.mxu0
        %v734 = vadd.f32 %v692, %v733
        %735 = vdwg.mxu0
        %736 = vmatpush.msra.mxu0 0.0
        %737 = vmatpush.msra.mxu0 0.0
        %738 = vmatpush.msra.mxu0 0.0
        %739 = vmatpush.msra.mxu0 0.0
        %740 = vmatpush.msra.mxu0 %v665
        %741 = vmatpush.msra.mxu0 %v663
        %742 = vmatpush.msra.mxu0 %v661
        %743 = vmatpush.msra.mxu0 %v659
        %744 = vmatpush.msra.mxu0 %v554
        %745 = vmatpush.msra.mxu0 %v551
        %746 = vmatpush.msra.mxu0 %v548
        %747 = vmatpush.msra.mxu0 %v545
        %748 = vmatpush.msra.mxu0 %v614
        %749 = vmatpush.msra.mxu0 %v612
        %750 = vmatpush.msra.mxu0 %v610
        %751 = vmatpush.msra.mxu0 %v608
        %752 = vmatmul.f32.gmra.mxu0 %v696
        %v753 = vpop.f32.mrf.mxu0
        %v754 = vadd.f32 %v677, %v753
        %755 = vmatmul.f32.gmra.mxu0 %v699
        %v756 = vpop.f32.mrf.mxu0
        %v757 = vadd.f32 %v682, %v756
        %758 = vmatmul.f32.gmra.mxu0 %v702
        %v759 = vpop.f32.mrf.mxu0
        %v760 = vadd.f32 %v687, %v759
        %761 = vmatmul.f32.gmra.mxu0 %v705
        %v762 = vpop.f32.mrf.mxu0
        %v763 = vadd.f32 %v692, %v762
        %764 = vdwg.mxu0
        %v765 = vmax.f32 %v725, 0.0
        %v766 = vmax.f32 %v754, 0.0
        %v767 = vmax.f32 %v728, 0.0
        %v768 = vmax.f32 %v757, 0.0
        %v769 = vmax.f32 %v731, 0.0
        %v770 = vmax.f32 %v760, 0.0
        %v771 = vmax.f32 %v734, 0.0
        %v772 = vmax.f32 %v763, 0.0
        %v773 = vld [vmem:[%s7] sm:$0xff]
        %v774 = vld [vmem:[%s7 + $0x8] sm:$0xff]
        %v775 = vld [vmem:[%s7 + $0x10] sm:$0xff]
        %v776 = vld [vmem:[%s7 + $0x18] sm:$0xff]
        %v777 = vld [vmem:[%s8] sm:$0xff]
        %v778 = vld [vmem:[%s8 + $0x8] sm:$0xff]
        %v779 = vld [vmem:[%s8 + $0x10] sm:$0xff]
        %v780 = vld [vmem:[%s8 + $0x18] sm:$0xff]
        %782 = vset.pattern.permute.xlu0 0
        %783 = vperm.xlu0 %782, %v777
        %v784 = vpop.permute.xlu0 %783
        %787 = vset.pattern.permute.xlu0 0
        %788 = vperm.xlu0 %787, %v778
        %v789 = vpop.permute.xlu0 %788
        %792 = vset.pattern.permute.xlu0 0
        %793 = vperm.xlu0 %792, %v779
        %v794 = vpop.permute.xlu0 %793
        %797 = vset.pattern.permute.xlu0 0
        %798 = vperm.xlu0 %797, %v780
        %v799 = vpop.permute.xlu0 %798
        %vm801 = vcmask 261120
        %v803 = vsel %vm801, %v773, 0
        %v806 = vsel %vm801, %v774, 0
        %v809 = vsel %vm801, %v775, 0
        %v812 = vsel %vm801, %v776, 0
        %814 = vmatpush.msra.mxu0 0.0
        %815 = vmatpush.msra.mxu0 0.0
        %816 = vmatpush.msra.mxu0 0.0
        %817 = vmatpush.msra.mxu0 0.0
        %818 = vmatpush.msra.mxu0 0.0
        %819 = vmatpush.msra.mxu0 0.0
        %820 = vmatpush.msra.mxu0 0.0
        %821 = vmatpush.msra.mxu0 0.0
        %822 = vmatpush.msra.mxu0 0.0
        %823 = vmatpush.msra.mxu0 0.0
        %824 = vmatpush.msra.mxu0 0.0
        %825 = vmatpush.msra.mxu0 0.0
        %826 = vmatpush.msra.mxu0 %v771
        %827 = vmatpush.msra.mxu0 %v769
        %828 = vmatpush.msra.mxu0 %v767
        %829 = vmatpush.msra.mxu0 %v765
        %830 = vmatmul.f32.gmra.mxu0 %v803
        %v831 = vpop.f32.mrf.mxu0
        %v832 = vadd.f32 %v784, %v831
        %833 = vmatmul.f32.gmra.mxu0 %v806
        %v834 = vpop.f32.mrf.mxu0
        %v835 = vadd.f32 %v789, %v834
        %836 = vmatmul.f32.gmra.mxu0 %v809
        %v837 = vpop.f32.mrf.mxu0
        %v838 = vadd.f32 %v794, %v837
        %839 = vmatmul.f32.gmra.mxu0 %v812
        %v840 = vpop.f32.mrf.mxu0
        %v841 = vadd.f32 %v799, %v840
        %842 = vdwg.mxu0
        %843 = vmatpush.msra.mxu0 0.0
        %844 = vmatpush.msra.mxu0 0.0
        %845 = vmatpush.msra.mxu0 0.0
        %846 = vmatpush.msra.mxu0 0.0
        %847 = vmatpush.msra.mxu0 0.0
        %848 = vmatpush.msra.mxu0 0.0
        %849 = vmatpush.msra.mxu0 0.0
        %850 = vmatpush.msra.mxu0 0.0
        %851 = vmatpush.msra.mxu0 0.0
        %852 = vmatpush.msra.mxu0 0.0
        %853 = vmatpush.msra.mxu0 0.0
        %854 = vmatpush.msra.mxu0 0.0
        %855 = vmatpush.msra.mxu0 %v772
        %856 = vmatpush.msra.mxu0 %v770
        %857 = vmatpush.msra.mxu0 %v768
        %858 = vmatpush.msra.mxu0 %v766
        %859 = vmatmul.f32.gmra.mxu0 %v803
        %v860 = vpop.f32.mrf.mxu0
        %v861 = vadd.f32 %v784, %v860
        %862 = vmatmul.f32.gmra.mxu0 %v806
        %v863 = vpop.f32.mrf.mxu0
        %v864 = vadd.f32 %v789, %v863
        %865 = vmatmul.f32.gmra.mxu0 %v809
        %v866 = vpop.f32.mrf.mxu0
        %v867 = vadd.f32 %v794, %v866
        %868 = vmatmul.f32.gmra.mxu0 %v812
        %v869 = vpop.f32.mrf.mxu0
        %v870 = vadd.f32 %v799, %v869
        %871 = vdwg.mxu0
        %v872 = vadd.f32 %v516, %v832
        %v873 = vadd.f32 %v545, %v861
        %v874 = vadd.f32 %v519, %v835
        %v875 = vadd.f32 %v548, %v864
        %v876 = vadd.f32 %v522, %v838
        %v877 = vadd.f32 %v551, %v867
        %v878 = vadd.f32 %v525, %v841
        %v879 = vadd.f32 %v554, %v870
        %vm880 = vcmp.ge.s32.totalorder %v456, 2
        %885 = vrot.lane.b32.xlu0 %v873, 2
        %v886 = vpop.permute.xlu0 %885
        %887 = vrot.lane.b32.xlu0 %v875, 2
        %v888 = vpop.permute.xlu0 %887
        %889 = vrot.lane.b32.xlu0 %v877, 2
        %v890 = vpop.permute.xlu0 %889
        %891 = vrot.lane.b32.xlu0 %v879, 2
        %v892 = vpop.permute.xlu0 %891
        %901 = vrot.lane.b32.xlu0 %v872, 2
        %v902 = vpop.permute.xlu0 %901
        %903 = vrot.lane.b32.xlu0 %v874, 2
        %v904 = vpop.permute.xlu0 %903
        %905 = vrot.lane.b32.xlu0 %v876, 2
        %v906 = vpop.permute.xlu0 %905
        %907 = vrot.lane.b32.xlu0 %v878, 2
        %v908 = vpop.permute.xlu0 %907
        %vm909 = vcmask 15360
        %v910 = vsel %vm909, %v902, %v886
        %v911 = vsel %vm909, %v904, %v888
        %v912 = vsel %vm909, %v906, %v890
        %v913 = vsel %vm909, %v908, %v892
        %v922 = vsel %vm909, %v886, %v902
        %v923 = vsel %vm909, %v888, %v904
        %v924 = vsel %vm909, %v890, %v906
        %v925 = vsel %vm909, %v892, %v908
        %v926 = vsel %vm880, 1, 0
        %v927 = vperm.slane %v926, 0
        %v928 = vperm.slane %v926, 1
        %vm929 = vcmp.eq.s32.totalorder %v927, 1
        %vm930 = vcmp.eq.s32.totalorder %v928, 1
        %v931 = vsel %vm929, %v922, 0.0
        %v932 = vsel %vm930, %v910, 0.0
        %v933 = vsel %vm929, %v923, 0.0
        %v934 = vsel %vm930, %v911, 0.0
        %v935 = vsel %vm929, %v924, 0.0
        %v936 = vsel %vm930, %v912, 0.0
        %v937 = vsel %vm929, %v925, 0.0
        %v938 = vsel %vm930, %v913, 0.0
        %vm939 = vcmp.lt.s32.totalorder %v456, 98
        %940 = vrot.lane.b32.xlu0 %v872, 126
        %v941 = vpop.permute.xlu0 %940
        %942 = vrot.lane.b32.xlu0 %v873, 126
        %v943 = vpop.permute.xlu0 %942
        %944 = vrot.lane.b32.xlu0 %v874, 126
        %v945 = vpop.permute.xlu0 %944
        %946 = vrot.lane.b32.xlu0 %v875, 126
        %v947 = vpop.permute.xlu0 %946
        %948 = vrot.lane.b32.xlu0 %v876, 126
        %v949 = vpop.permute.xlu0 %948
        %950 = vrot.lane.b32.xlu0 %v877, 126
        %v951 = vpop.permute.xlu0 %950
        %952 = vrot.lane.b32.xlu0 %v878, 126
        %v953 = vpop.permute.xlu0 %952
        %954 = vrot.lane.b32.xlu0 %v879, 126
        %v955 = vpop.permute.xlu0 %954
        %vm956 = vcmask 1031168
        %v957 = vsel %vm956, %v941, %v943
        %v958 = vsel %vm956, %v945, %v947
        %v959 = vsel %vm956, %v949, %v951
        %v960 = vsel %vm956, %v953, %v955
        %v973 = vsel %vm956, %v943, %v941
        %v974 = vsel %vm956, %v947, %v945
        %v975 = vsel %vm956, %v951, %v949
        %v976 = vsel %vm956, %v955, %v953
        %v977 = vsel %vm939, 1, 0
        %v978 = vperm.slane %v977, 0
        %v979 = vperm.slane %v977, 1
        %vm980 = vcmp.eq.s32.totalorder %v978, 1
        %vm981 = vcmp.eq.s32.totalorder %v979, 1
        %v982 = vsel %vm980, %v957, 0.0
        %v983 = vsel %vm981, %v973, 0.0
        %v984 = vsel %vm980, %v958, 0.0
        %v985 = vsel %vm981, %v974, 0.0
        %v986 = vsel %vm980, %v959, 0.0
        %v987 = vsel %vm981, %v975, 0.0
        %v988 = vsel %vm980, %v960, 0.0
        %v989 = vsel %vm981, %v976, 0.0
        %s990 = scalar_lea.vmem %s5, 32
        %v991 = vld [vmem:[%s990] sm:$0xff]
        %v992 = vld [vmem:[%s990 + $0x8] sm:$0xff]
        %v993 = vld [vmem:[%s990 + $0x10] sm:$0xff]
        %v994 = vld [vmem:[%s990 + $0x18] sm:$0xff]
        %s995 = scalar_lea.vmem %s6, 32
        %v996 = vld [vmem:[%s995] sm:$0xff]
        %v997 = vld [vmem:[%s995 + $0x8] sm:$0xff]
        %v998 = vld [vmem:[%s995 + $0x10] sm:$0xff]
        %v999 = vld [vmem:[%s995 + $0x18] sm:$0xff]
        %1001 = vset.pattern.permute.xlu0 0
        %1002 = vperm.xlu0 %1001, %v996
        %v1003 = vpop.permute.xlu0 %1002
        %1006 = vset.pattern.permute.xlu0 0
        %1007 = vperm.xlu0 %1006, %v997
        %v1008 = vpop.permute.xlu0 %1007
        %1011 = vset.pattern.permute.xlu0 0
        %1012 = vperm.xlu0 %1011, %v998
        %v1013 = vpop.permute.xlu0 %1012
        %1016 = vset.pattern.permute.xlu0 0
        %1017 = vperm.xlu0 %1016, %v999
        %v1018 = vpop.permute.xlu0 %1017
        %v1021 = vsel %vm694, %v991, 0
        %v1024 = vsel %vm694, %v992, 0
        %v1027 = vsel %vm694, %v993, 0
        %v1030 = vsel %vm694, %v994, 0
        %1032 = vmatpush.msra.mxu0 0.0
        %1033 = vmatpush.msra.mxu0 0.0
        %1034 = vmatpush.msra.mxu0 0.0
        %1035 = vmatpush.msra.mxu0 0.0
        %1036 = vmatpush.msra.mxu0 %v988
        %1037 = vmatpush.msra.mxu0 %v986
        %1038 = vmatpush.msra.mxu0 %v984
        %1039 = vmatpush.msra.mxu0 %v982
        %1040 = vmatpush.msra.mxu0 %v878
        %1041 = vmatpush.msra.mxu0 %v876
        %1042 = vmatpush.msra.mxu0 %v874
        %1043 = vmatpush.msra.mxu0 %v872
        %1044 = vmatpush.msra.mxu0 %v937
        %1045 = vmatpush.msra.mxu0 %v935
        %1046 = vmatpush.msra.mxu0 %v933
        %1047 = vmatpush.msra.mxu0 %v931
        %1048 = vmatmul.f32.gmra.mxu0 %v1021
        %v1049 = vpop.f32.mrf.mxu0
        %v1050 = vadd.f32 %v1003, %v1049
        %1051 = vmatmul.f32.gmra.mxu0 %v1024
        %v1052 = vpop.f32.mrf.mxu0
        %v1053 = vadd.f32 %v1008, %v1052
        %1054 = vmatmul.f32.gmra.mxu0 %v1027
        %v1055 = vpop.f32.mrf.mxu0
        %v1056 = vadd.f32 %v1013, %v1055
        %1057 = vmatmul.f32.gmra.mxu0 %v1030
        %v1058 = vpop.f32.mrf.mxu0
        %v1059 = vadd.f32 %v1018, %v1058
        %1060 = vdwg.mxu0
        %1061 = vmatpush.msra.mxu0 0.0
        %1062 = vmatpush.msra.mxu0 0.0
        %1063 = vmatpush.msra.mxu0 0.0
        %1064 = vmatpush.msra.mxu0 0.0
        %1065 = vmatpush.msra.mxu0 %v989
        %1066 = vmatpush.msra.mxu0 %v987
        %1067 = vmatpush.msra.mxu0 %v985
        %1068 = vmatpush.msra.mxu0 %v983
        %1069 = vmatpush.msra.mxu0 %v879
        %1070 = vmatpush.msra.mxu0 %v877
        %1071 = vmatpush.msra.mxu0 %v875
        %1072 = vmatpush.msra.mxu0 %v873
        %1073 = vmatpush.msra.mxu0 %v938
        %1074 = vmatpush.msra.mxu0 %v936
        %1075 = vmatpush.msra.mxu0 %v934
        %1076 = vmatpush.msra.mxu0 %v932
        %1077 = vmatmul.f32.gmra.mxu0 %v1021
        %v1078 = vpop.f32.mrf.mxu0
        %v1079 = vadd.f32 %v1003, %v1078
        %1080 = vmatmul.f32.gmra.mxu0 %v1024
        %v1081 = vpop.f32.mrf.mxu0
        %v1082 = vadd.f32 %v1008, %v1081
        %1083 = vmatmul.f32.gmra.mxu0 %v1027
        %v1084 = vpop.f32.mrf.mxu0
        %v1085 = vadd.f32 %v1013, %v1084
        %1086 = vmatmul.f32.gmra.mxu0 %v1030
        %v1087 = vpop.f32.mrf.mxu0
        %v1088 = vadd.f32 %v1018, %v1087
        %1089 = vdwg.mxu0
        %v1090 = vmax.f32 %v1050, 0.0
        %v1091 = vmax.f32 %v1079, 0.0
        %v1092 = vmax.f32 %v1053, 0.0
        %v1093 = vmax.f32 %v1082, 0.0
        %v1094 = vmax.f32 %v1056, 0.0
        %v1095 = vmax.f32 %v1085, 0.0
        %v1096 = vmax.f32 %v1059, 0.0
        %v1097 = vmax.f32 %v1088, 0.0
        %s1098 = scalar_lea.vmem %s7, 32
        %v1099 = vld [vmem:[%s1098] sm:$0xff]
        %v1100 = vld [vmem:[%s1098 + $0x8] sm:$0xff]
        %v1101 = vld [vmem:[%s1098 + $0x10] sm:$0xff]
        %v1102 = vld [vmem:[%s1098 + $0x18] sm:$0xff]
        %s1103 = scalar_lea.vmem %s8, 32
        %v1104 = vld [vmem:[%s1103] sm:$0xff]
        %v1105 = vld [vmem:[%s1103 + $0x8] sm:$0xff]
        %v1106 = vld [vmem:[%s1103 + $0x10] sm:$0xff]
        %v1107 = vld [vmem:[%s1103 + $0x18] sm:$0xff]
        %1109 = vset.pattern.permute.xlu0 0
        %1110 = vperm.xlu0 %1109, %v1104
        %v1111 = vpop.permute.xlu0 %1110
        %1114 = vset.pattern.permute.xlu0 0
        %1115 = vperm.xlu0 %1114, %v1105
        %v1116 = vpop.permute.xlu0 %1115
        %1119 = vset.pattern.permute.xlu0 0
        %1120 = vperm.xlu0 %1119, %v1106
        %v1121 = vpop.permute.xlu0 %1120
        %1124 = vset.pattern.permute.xlu0 0
        %1125 = vperm.xlu0 %1124, %v1107
        %v1126 = vpop.permute.xlu0 %1125
        %v1129 = vsel %vm801, %v1099, 0
        %v1132 = vsel %vm801, %v1100, 0
        %v1135 = vsel %vm801, %v1101, 0
        %v1138 = vsel %vm801, %v1102, 0
        %1140 = vmatpush.msra.mxu0 0.0
        %1141 = vmatpush.msra.mxu0 0.0
        %1142 = vmatpush.msra.mxu0 0.0
        %1143 = vmatpush.msra.mxu0 0.0
        %1144 = vmatpush.msra.mxu0 0.0
        %1145 = vmatpush.msra.mxu0 0.0
        %1146 = vmatpush.msra.mxu0 0.0
        %1147 = vmatpush.msra.mxu0 0.0
        %1148 = vmatpush.msra.mxu0 0.0
        %1149 = vmatpush.msra.mxu0 0.0
        %1150 = vmatpush.msra.mxu0 0.0
        %1151 = vmatpush.msra.mxu0 0.0
        %1152 = vmatpush.msra.mxu0 %v1096
        %1153 = vmatpush.msra.mxu0 %v1094
        %1154 = vmatpush.msra.mxu0 %v1092
        %1155 = vmatpush.msra.mxu0 %v1090
        %1156 = vmatmul.f32.gmra.mxu0 %v1129
        %v1157 = vpop.f32.mrf.mxu0
        %v1158 = vadd.f32 %v1111, %v1157
        %1159 = vmatmul.f32.gmra.mxu0 %v1132
        %v1160 = vpop.f32.mrf.mxu0
        %v1161 = vadd.f32 %v1116, %v1160
        %1162 = vmatmul.f32.gmra.mxu0 %v1135
        %v1163 = vpop.f32.mrf.mxu0
        %v1164 = vadd.f32 %v1121, %v1163
        %1165 = vmatmul.f32.gmra.mxu0 %v1138
        %v1166 = vpop.f32.mrf.mxu0
        %v1167 = vadd.f32 %v1126, %v1166
        %1168 = vdwg.mxu0
        %1169 = vmatpush.msra.mxu0 0.0
        %1170 = vmatpush.msra.mxu0 0.0
        %1171 = vmatpush.msra.mxu0 0.0
        %1172 = vmatpush.msra.mxu0 0.0
        %1173 = vmatpush.msra.mxu0 0.0
        %1174 = vmatpush.msra.mxu0 0.0
        %1175 = vmatpush.msra.mxu0 0.0
        %1176 = vmatpush.msra.mxu0 0.0
        %1177 = vmatpush.msra.mxu0 0.0
        %1178 = vmatpush.msra.mxu0 0.0
        %1179 = vmatpush.msra.mxu0 0.0
        %1180 = vmatpush.msra.mxu0 0.0
        %1181 = vmatpush.msra.mxu0 %v1097
        %1182 = vmatpush.msra.mxu0 %v1095
        %1183 = vmatpush.msra.mxu0 %v1093
        %1184 = vmatpush.msra.mxu0 %v1091
        %1185 = vmatmul.f32.gmra.mxu0 %v1129
        %v1186 = vpop.f32.mrf.mxu0
        %v1187 = vadd.f32 %v1111, %v1186
        %1188 = vmatmul.f32.gmra.mxu0 %v1132
        %v1189 = vpop.f32.mrf.mxu0
        %v1190 = vadd.f32 %v1116, %v1189
        %1191 = vmatmul.f32.gmra.mxu0 %v1135
        %v1192 = vpop.f32.mrf.mxu0
        %v1193 = vadd.f32 %v1121, %v1192
        %1194 = vmatmul.f32.gmra.mxu0 %v1138
        %v1195 = vpop.f32.mrf.mxu0
        %v1196 = vadd.f32 %v1126, %v1195
        %1197 = vdwg.mxu0
        %v1198 = vadd.f32 %v872, %v1158
        %v1199 = vadd.f32 %v873, %v1187
        %v1200 = vadd.f32 %v874, %v1161
        %v1201 = vadd.f32 %v875, %v1190
        %v1202 = vadd.f32 %v876, %v1164
        %v1203 = vadd.f32 %v877, %v1193
        %v1204 = vadd.f32 %v878, %v1167
        %v1205 = vadd.f32 %v879, %v1196
        %vm1206 = vcmp.ge.s32.totalorder %v456, 4
        %1211 = vrot.lane.b32.xlu0 %v1199, 4
        %v1212 = vpop.permute.xlu0 %1211
        %1213 = vrot.lane.b32.xlu0 %v1201, 4
        %v1214 = vpop.permute.xlu0 %1213
        %1215 = vrot.lane.b32.xlu0 %v1203, 4
        %v1216 = vpop.permute.xlu0 %1215
        %1217 = vrot.lane.b32.xlu0 %v1205, 4
        %v1218 = vpop.permute.xlu0 %1217
        %1227 = vrot.lane.b32.xlu0 %v1198, 4
        %v1228 = vpop.permute.xlu0 %1227
        %1229 = vrot.lane.b32.xlu0 %v1200, 4
        %v1230 = vpop.permute.xlu0 %1229
        %1231 = vrot.lane.b32.xlu0 %v1202, 4
        %v1232 = vpop.permute.xlu0 %1231
        %1233 = vrot.lane.b32.xlu0 %v1204, 4
        %v1234 = vpop.permute.xlu0 %1233
        %vm1235 = vcmask 31744
        %v1236 = vsel %vm1235, %v1228, %v1212
        %v1237 = vsel %vm1235, %v1230, %v1214
        %v1238 = vsel %vm1235, %v1232, %v1216
        %v1239 = vsel %vm1235, %v1234, %v1218
        %v1248 = vsel %vm1235, %v1212, %v1228
        %v1249 = vsel %vm1235, %v1214, %v1230
        %v1250 = vsel %vm1235, %v1216, %v1232
        %v1251 = vsel %vm1235, %v1218, %v1234
        %v1252 = vsel %vm1206, 1, 0
        %v1253 = vperm.slane %v1252, 0
        %v1254 = vperm.slane %v1252, 1
        %vm1255 = vcmp.eq.s32.totalorder %v1253, 1
        %vm1256 = vcmp.eq.s32.totalorder %v1254, 1
        %v1257 = vsel %vm1255, %v1248, 0.0
        %v1258 = vsel %vm1256, %v1236, 0.0
        %v1259 = vsel %vm1255, %v1249, 0.0
        %v1260 = vsel %vm1256, %v1237, 0.0
        %v1261 = vsel %vm1255, %v1250, 0.0
        %v1262 = vsel %vm1256, %v1238, 0.0
        %v1263 = vsel %vm1255, %v1251, 0.0
        %v1264 = vsel %vm1256, %v1239, 0.0
        %vm1265 = vcmp.lt.s32.totalorder %v456, 96
        %1266 = vrot.lane.b32.xlu0 %v1198, 124
        %v1267 = vpop.permute.xlu0 %1266
        %1268 = vrot.lane.b32.xlu0 %v1199, 124
        %v1269 = vpop.permute.xlu0 %1268
        %1270 = vrot.lane.b32.xlu0 %v1200, 124
        %v1271 = vpop.permute.xlu0 %1270
        %1272 = vrot.lane.b32.xlu0 %v1201, 124
        %v1273 = vpop.permute.xlu0 %1272
        %1274 = vrot.lane.b32.xlu0 %v1202, 124
        %v1275 = vpop.permute.xlu0 %1274
        %1276 = vrot.lane.b32.xlu0 %v1203, 124
        %v1277 = vpop.permute.xlu0 %1276
        %1278 = vrot.lane.b32.xlu0 %v1204, 124
        %v1279 = vpop.permute.xlu0 %1278
        %1280 = vrot.lane.b32.xlu0 %v1205, 124
        %v1281 = vpop.permute.xlu0 %1280
        %vm1282 = vcmask 1014784
        %v1283 = vsel %vm1282, %v1267, %v1269
        %v1284 = vsel %vm1282, %v1271, %v1273
        %v1285 = vsel %vm1282, %v1275, %v1277
        %v1286 = vsel %vm1282, %v1279, %v1281
        %v1299 = vsel %vm1282, %v1269, %v1267
        %v1300 = vsel %vm1282, %v1273, %v1271
        %v1301 = vsel %vm1282, %v1277, %v1275
        %v1302 = vsel %vm1282, %v1281, %v1279
        %v1303 = vsel %vm1265, 1, 0
        %v1304 = vperm.slane %v1303, 0
        %v1305 = vperm.slane %v1303, 1
        %vm1306 = vcmp.eq.s32.totalorder %v1304, 1
        %vm1307 = vcmp.eq.s32.totalorder %v1305, 1
        %v1308 = vsel %vm1306, %v1283, 0.0
        %v1309 = vsel %vm1307, %v1299, 0.0
        %v1310 = vsel %vm1306, %v1284, 0.0
        %v1311 = vsel %vm1307, %v1300, 0.0
        %v1312 = vsel %vm1306, %v1285, 0.0
        %v1313 = vsel %vm1307, %v1301, 0.0
        %v1314 = vsel %vm1306, %v1286, 0.0
        %v1315 = vsel %vm1307, %v1302, 0.0
        %s1316 = scalar_lea.vmem %s5, 64
        %v1317 = vld [vmem:[%s1316] sm:$0xff]
        %v1318 = vld [vmem:[%s1316 + $0x8] sm:$0xff]
        %v1319 = vld [vmem:[%s1316 + $0x10] sm:$0xff]
        %v1320 = vld [vmem:[%s1316 + $0x18] sm:$0xff]
        %s1321 = scalar_lea.vmem %s6, 64
        %v1322 = vld [vmem:[%s1321] sm:$0xff]
        %v1323 = vld [vmem:[%s1321 + $0x8] sm:$0xff]
        %v1324 = vld [vmem:[%s1321 + $0x10] sm:$0xff]
        %v1325 = vld [vmem:[%s1321 + $0x18] sm:$0xff]
        %1327 = vset.pattern.permute.xlu0 0
        %1328 = vperm.xlu0 %1327, %v1322
        %v1329 = vpop.permute.xlu0 %1328
        %1332 = vset.pattern.permute.xlu0 0
        %1333 = vperm.xlu0 %1332, %v1323
        %v1334 = vpop.permute.xlu0 %1333
        %1337 = vset.pattern.permute.xlu0 0
        %1338 = vperm.xlu0 %1337, %v1324
        %v1339 = vpop.permute.xlu0 %1338
        %1342 = vset.pattern.permute.xlu0 0
        %1343 = vperm.xlu0 %1342, %v1325
        %v1344 = vpop.permute.xlu0 %1343
        %v1347 = vsel %vm694, %v1317, 0
        %v1350 = vsel %vm694, %v1318, 0
        %v1353 = vsel %vm694, %v1319, 0
        %v1356 = vsel %vm694, %v1320, 0
        %1358 = vmatpush.msra.mxu0 0.0
        %1359 = vmatpush.msra.mxu0 0.0
        %1360 = vmatpush.msra.mxu0 0.0
        %1361 = vmatpush.msra.mxu0 0.0
        %1362 = vmatpush.msra.mxu0 %v1314
        %1363 = vmatpush.msra.mxu0 %v1312
        %1364 = vmatpush.msra.mxu0 %v1310
        %1365 = vmatpush.msra.mxu0 %v1308
        %1366 = vmatpush.msra.mxu0 %v1204
        %1367 = vmatpush.msra.mxu0 %v1202
        %1368 = vmatpush.msra.mxu0 %v1200
        %1369 = vmatpush.msra.mxu0 %v1198
        %1370 = vmatpush.msra.mxu0 %v1263
        %1371 = vmatpush.msra.mxu0 %v1261
        %1372 = vmatpush.msra.mxu0 %v1259
        %1373 = vmatpush.msra.mxu0 %v1257
        %1374 = vmatmul.f32.gmra.mxu0 %v1347
        %v1375 = vpop.f32.mrf.mxu0
        %v1376 = vadd.f32 %v1329, %v1375
        %1377 = vmatmul.f32.gmra.mxu0 %v1350
        %v1378 = vpop.f32.mrf.mxu0
        %v1379 = vadd.f32 %v1334, %v1378
        %1380 = vmatmul.f32.gmra.mxu0 %v1353
        %v1381 = vpop.f32.mrf.mxu0
        %v1382 = vadd.f32 %v1339, %v1381
        %1383 = vmatmul.f32.gmra.mxu0 %v1356
        %v1384 = vpop.f32.mrf.mxu0
        %v1385 = vadd.f32 %v1344, %v1384
        %1386 = vdwg.mxu0
        %1387 = vmatpush.msra.mxu0 0.0
        %1388 = vmatpush.msra.mxu0 0.0
        %1389 = vmatpush.msra.mxu0 0.0
        %1390 = vmatpush.msra.mxu0 0.0
        %1391 = vmatpush.msra.mxu0 %v1315
        %1392 = vmatpush.msra.mxu0 %v1313
        %1393 = vmatpush.msra.mxu0 %v1311
        %1394 = vmatpush.msra.mxu0 %v1309
        %1395 = vmatpush.msra.mxu0 %v1205
        %1396 = vmatpush.msra.mxu0 %v1203
        %1397 = vmatpush.msra.mxu0 %v1201
        %1398 = vmatpush.msra.mxu0 %v1199
        %1399 = vmatpush.msra.mxu0 %v1264
        %1400 = vmatpush.msra.mxu0 %v1262
        %1401 = vmatpush.msra.mxu0 %v1260
        %1402 = vmatpush.msra.mxu0 %v1258
        %1403 = vmatmul.f32.gmra.mxu0 %v1347
        %v1404 = vpop.f32.mrf.mxu0
        %v1405 = vadd.f32 %v1329, %v1404
        %1406 = vmatmul.f32.gmra.mxu0 %v1350
        %v1407 = vpop.f32.mrf.mxu0
        %v1408 = vadd.f32 %v1334, %v1407
        %1409 = vmatmul.f32.gmra.mxu0 %v1353
        %v1410 = vpop.f32.mrf.mxu0
        %v1411 = vadd.f32 %v1339, %v1410
        %1412 = vmatmul.f32.gmra.mxu0 %v1356
        %v1413 = vpop.f32.mrf.mxu0
        %v1414 = vadd.f32 %v1344, %v1413
        %1415 = vdwg.mxu0
        %v1416 = vmax.f32 %v1376, 0.0
        %v1417 = vmax.f32 %v1405, 0.0
        %v1418 = vmax.f32 %v1379, 0.0
        %v1419 = vmax.f32 %v1408, 0.0
        %v1420 = vmax.f32 %v1382, 0.0
        %v1421 = vmax.f32 %v1411, 0.0
        %v1422 = vmax.f32 %v1385, 0.0
        %v1423 = vmax.f32 %v1414, 0.0
        %s1424 = scalar_lea.vmem %s7, 64
        %v1425 = vld [vmem:[%s1424] sm:$0xff]
        %v1426 = vld [vmem:[%s1424 + $0x8] sm:$0xff]
        %v1427 = vld [vmem:[%s1424 + $0x10] sm:$0xff]
        %v1428 = vld [vmem:[%s1424 + $0x18] sm:$0xff]
        %s1429 = scalar_lea.vmem %s8, 64
        %v1430 = vld [vmem:[%s1429] sm:$0xff]
        %v1431 = vld [vmem:[%s1429 + $0x8] sm:$0xff]
        %v1432 = vld [vmem:[%s1429 + $0x10] sm:$0xff]
        %v1433 = vld [vmem:[%s1429 + $0x18] sm:$0xff]
        %1435 = vset.pattern.permute.xlu0 0
        %1436 = vperm.xlu0 %1435, %v1430
        %v1437 = vpop.permute.xlu0 %1436
        %1440 = vset.pattern.permute.xlu0 0
        %1441 = vperm.xlu0 %1440, %v1431
        %v1442 = vpop.permute.xlu0 %1441
        %1445 = vset.pattern.permute.xlu0 0
        %1446 = vperm.xlu0 %1445, %v1432
        %v1447 = vpop.permute.xlu0 %1446
        %1450 = vset.pattern.permute.xlu0 0
        %1451 = vperm.xlu0 %1450, %v1433
        %v1452 = vpop.permute.xlu0 %1451
        %v1455 = vsel %vm801, %v1425, 0
        %v1458 = vsel %vm801, %v1426, 0
        %v1461 = vsel %vm801, %v1427, 0
        %v1464 = vsel %vm801, %v1428, 0
        %1466 = vmatpush.msra.mxu0 0.0
        %1467 = vmatpush.msra.mxu0 0.0
        %1468 = vmatpush.msra.mxu0 0.0
        %1469 = vmatpush.msra.mxu0 0.0
        %1470 = vmatpush.msra.mxu0 0.0
        %1471 = vmatpush.msra.mxu0 0.0
        %1472 = vmatpush.msra.mxu0 0.0
        %1473 = vmatpush.msra.mxu0 0.0
        %1474 = vmatpush.msra.mxu0 0.0
        %1475 = vmatpush.msra.mxu0 0.0
        %1476 = vmatpush.msra.mxu0 0.0
        %1477 = vmatpush.msra.mxu0 0.0
        %1478 = vmatpush.msra.mxu0 %v1422
        %1479 = vmatpush.msra.mxu0 %v1420
        %1480 = vmatpush.msra.mxu0 %v1418
        %1481 = vmatpush.msra.mxu0 %v1416
        %1482 = vmatmul.f32.gmra.mxu0 %v1455
        %v1483 = vpop.f32.mrf.mxu0
        %v1484 = vadd.f32 %v1437, %v1483
        %1485 = vmatmul.f32.gmra.mxu0 %v1458
        %v1486 = vpop.f32.mrf.mxu0
        %v1487 = vadd.f32 %v1442, %v1486
        %1488 = vmatmul.f32.gmra.mxu0 %v1461
        %v1489 = vpop.f32.mrf.mxu0
        %v1490 = vadd.f32 %v1447, %v1489
        %1491 = vmatmul.f32.gmra.mxu0 %v1464
        %v1492 = vpop.f32.mrf.mxu0
        %v1493 = vadd.f32 %v1452, %v1492
        %1494 = vdwg.mxu0
        %1495 = vmatpush.msra.mxu0 0.0
        %1496 = vmatpush.msra.mxu0 0.0
        %1497 = vmatpush.msra.mxu0 0.0
        %1498 = vmatpush.msra.mxu0 0.0
        %1499 = vmatpush.msra.mxu0 0.0
        %1500 = vmatpush.msra.mxu0 0.0
        %1501 = vmatpush.msra.mxu0 0.0
        %1502 = vmatpush.msra.mxu0 0.0
        %1503 = vmatpush.msra.mxu0 0.0
        %1504 = vmatpush.msra.mxu0 0.0
        %1505 = vmatpush.msra.mxu0 0.0
        %1506 = vmatpush.msra.mxu0 0.0
        %1507 = vmatpush.msra.mxu0 %v1423
        %1508 = vmatpush.msra.mxu0 %v1421
        %1509 = vmatpush.msra.mxu0 %v1419
        %1510 = vmatpush.msra.mxu0 %v1417
        %1511 = vmatmul.f32.gmra.mxu0 %v1455
        %v1512 = vpop.f32.mrf.mxu0
        %v1513 = vadd.f32 %v1437, %v1512
        %1514 = vmatmul.f32.gmra.mxu0 %v1458
        %v1515 = vpop.f32.mrf.mxu0
        %v1516 = vadd.f32 %v1442, %v1515
        %1517 = vmatmul.f32.gmra.mxu0 %v1461
        %v1518 = vpop.f32.mrf.mxu0
        %v1519 = vadd.f32 %v1447, %v1518
        %1520 = vmatmul.f32.gmra.mxu0 %v1464
        %v1521 = vpop.f32.mrf.mxu0
        %v1522 = vadd.f32 %v1452, %v1521
        %1523 = vdwg.mxu0
        %v1524 = vadd.f32 %v1198, %v1484
        %v1525 = vadd.f32 %v1199, %v1513
        %v1526 = vadd.f32 %v1200, %v1487
        %v1527 = vadd.f32 %v1201, %v1516
        %v1528 = vadd.f32 %v1202, %v1490
        %v1529 = vadd.f32 %v1203, %v1519
        %v1530 = vadd.f32 %v1204, %v1493
        %v1531 = vadd.f32 %v1205, %v1522
        %v1532 = vld [vmem:[%s9] sm:$0xff]
        %v1533 = vld [vmem:[%s10] sm:$0xff]
        %1535 = vset.pattern.permute.xlu0 0
        %1536 = vperm.xlu0 %1535, %v1533
        %v1537 = vpop.permute.xlu0 %1536
        %v1540 = vsel %vm801, %v1532, 0
        %1542 = vmatpush.msra.mxu0 0.0
        %1543 = vmatpush.msra.mxu0 0.0
        %1544 = vmatpush.msra.mxu0 0.0
        %1545 = vmatpush.msra.mxu0 0.0
        %1546 = vmatpush.msra.mxu0 0.0
        %1547 = vmatpush.msra.mxu0 0.0
        %1548 = vmatpush.msra.mxu0 0.0
        %1549 = vmatpush.msra.mxu0 0.0
        %1550 = vmatpush.msra.mxu0 0.0
        %1551 = vmatpush.msra.mxu0 0.0
        %1552 = vmatpush.msra.mxu0 0.0
        %1553 = vmatpush.msra.mxu0 0.0
        %1554 = vmatpush.msra.mxu0 %v1530
        %1555 = vmatpush.msra.mxu0 %v1528
        %1556 = vmatpush.msra.mxu0 %v1526
        %1557 = vmatpush.msra.mxu0 %v1524
        %1558 = vmatmul.f32.gmra.mxu0 %v1540
        %v1559 = vpop.f32.mrf.mxu0
        %v1560 = vadd.f32 %v1537, %v1559
        %1561 = vdwg.mxu0
        %1562 = vmatpush.msra.mxu0 0.0
        %1563 = vmatpush.msra.mxu0 0.0
        %1564 = vmatpush.msra.mxu0 0.0
        %1565 = vmatpush.msra.mxu0 0.0
        %1566 = vmatpush.msra.mxu0 0.0
        %1567 = vmatpush.msra.mxu0 0.0
        %1568 = vmatpush.msra.mxu0 0.0
        %1569 = vmatpush.msra.mxu0 0.0
        %1570 = vmatpush.msra.mxu0 0.0
        %1571 = vmatpush.msra.mxu0 0.0
        %1572 = vmatpush.msra.mxu0 0.0
        %1573 = vmatpush.msra.mxu0 0.0
        %1574 = vmatpush.msra.mxu0 %v1531
        %1575 = vmatpush.msra.mxu0 %v1529
        %1576 = vmatpush.msra.mxu0 %v1527
        %1577 = vmatpush.msra.mxu0 %v1525
        %1578 = vmatmul.f32.gmra.mxu0 %v1540
        %v1579 = vpop.f32.mrf.mxu0
        %v1580 = vadd.f32 %v1537, %v1579
        %1581 = vdwg.mxu0
        %v1583 = vperm.slane %v455, 0
        %v1584 = vperm.slane %v455, 1
        %v1587 = vmul.f32 %v1560, %v1583
        %v1588 = vmul.f32 %v1580, %v1584
        %1589 = vst [vmem:[%s438] sm:$0xff] %v1587
        %1590 = vst [vmem:[%s438 + $0x8] sm:$0xff] %v1588
        %s1591 = sand.u32 %s279, 1
        %s1592 = scalar_lea.sflag [#allocation4], %s1591
        %s1593 = sand.u32 %s279, 1
        %s1594 = smul.addr %s1593, 16
        %s1595 = scalar_lea.vmem [#allocation3], %s1594
        // Predicated region
        $region88: #{tpu_custom_call.1} parent=82 // pred_check
          %p1596 = pneg %p289
        $region89: #{tpu_custom_call.1} parent=82 // pred_check_branch
          %1598 = sbr.rel (%p1596) target = $region91
        $region90: #{tpu_custom_call.1} parent=82 // pred_region
          %s1599 = smul.u32 2, %s25
          %1601 = vsyncadd %s1592, 0
          %s1602 = smul.addr %s1599, 8
          %s1603 = scalar_lea.hbm %s11, %s1602
          %s1605 = sshll.u32 %s1595, 4
          %s1606 = int_to_ptr.vmem [resolvable:$true] %s1605
          %s1607 = sshll.u32 %s1603, 4
          %s1608 = int_to_ptr.hbm [resolvable:$true] %s1607
          %1610 = dma.vmem_to_hbm [thread:$0]  %s1606, 256, %s1608, %s1592
        $region91: #{tpu_custom_call.1} parent=82 // pred_fallthru
          _
      $region83: #{tpu_custom_call.1} parent=5 // pred_fallthru
        _
      %p1611 = scmp.le.s32.totalorder 2, %s20
      // Predicated region
      $region92: #{tpu_custom_call.1} parent=5 // pred_check
        %p1612 = pneg %p1611
      $region93: #{tpu_custom_call.1} parent=5 // pred_check_branch
        %1614 = sbr.rel (%p1612) target = $region95
      $region94: #{tpu_custom_call.1} parent=5 // pred_region
        %s1615 = ssub.s32 %s20, 2
        // Predicated region
        $region96: #{tpu_custom_call.1} parent=94 // pred_check
          %p1616 = pneg %p295
        $region97: #{tpu_custom_call.1} parent=94 // pred_check_branch
          %1618 = sbr.rel (%p1616) target = $region99
        $region98: #{tpu_custom_call.1} parent=94 // pred_region
          %s1619 = sand.u32 %s280, 1
          %s1620 = scalar_lea.sflag [#allocation4], %s1619
          %s1621 = sand.u32 %s280, 1
          %s1622 = smul.addr %s1621, 16
          %s1623 = scalar_lea.vmem [#allocation3], %s1622
          %1625 = dma.done %s1620, 256
        $region99: #{tpu_custom_call.1} parent=94 // pred_fallthru
          _
      $region95: #{tpu_custom_call.1} parent=5 // pred_fallthru
        _
    $region6: #{tpu_custom_call.1} parent=1 // loop_footer
      %s24 = sadd.s32 1, %s20
    $region7: #{tpu_custom_call.1} parent=1 // loop_footer_branch
      %19 = sbr.rel target = $region3
    $region8: #{tpu_custom_call.1} parent=1 // loop_exit
      _
    %1626 = vsyncpa [#allocation4], 1
    %s1627 = scalar_lea.sflag [#allocation4], 1
    %1628 = vsyncpa %s1627, 1

</llo_original>
